<compile_context>
chip_gen: v7x
topology: tpu7x:2x2x1
jax: 0.10.0
libtpu: 0.0.40
codegen_flags: <defaults>
</compile_context>

<pallas_src>
import jax
import jax.numpy as jnp
from jax.experimental import pallas as pl
from jax.experimental.pallas import tpu as pltpu


# --------------------------------------------------------------------------- #
# Fused kernel wrapper
# --------------------------------------------------------------------------- #
def out_block_pallas(x2d, wband, shift_w, rwcT, rhB, b2,
                     *, Nb, Hin, Hout, Wout, WCin, WCout, band_pitch):
    """x2d:   (n_blk*Nb*Hin, Win*Cin) f32, batch stacked along rows.
    wband:   (3*band_pitch, Win*Cout) banded conv3x3 weight, BN scale folded in.
    shift_w: (1, Win*Cout) folded BN shift, tiled over W.
    rwcT:    (Win*Cout, Wout) width-interp matrix with the 1x1-conv weight folded in.
    rhB:     (Nb*Hout, Nb*Hin) block-diagonal row-interp matrix.
    b2:      (1, 1) conv2 bias (SMEM scalar).
    Returns  (n_blk*Nb*Hout, Wout) f32."""
    Kband = 3 * band_pitch
    n_blk = x2d.shape[0] // (Nb * Hin)

    def kernel(x_ref, wband_ref, shift_ref, rwcT_ref, rhB_ref, b2_ref,
               o_ref, rows_ref):
        # ---- zero-init the im2row scratch ONCE ----------------------------- #
        # Per-step stores below fully overwrite every element that changes
        # between batch blocks; zero border rows / alignment-pad lanes are
        # never written again (requires sequential grid traversal).
        @pl.when(pl.program_id(0) == 0)
        def _():
            rows_ref[...] = jnp.zeros_like(rows_ref)

        x = x_ref[...]                                        # (Nb*Hin, WCin)

        # ---- build zero-padded im2row matrix (128-lane-aligned bands) ------ #
        # rows[h, kh*band_pitch + ww*Cin + ci] = x_img[h+kh-1, ww, ci] (0 at borders)
        rows_ref[:, band_pitch:band_pitch + WCin] = x                  # kh = 1
        for n in range(Nb):                                            # static loop
            r0 = n * Hin
            rows_ref[r0 + 1:r0 + Hin, 0:WCin] = x[r0:r0 + Hin - 1, :]  # kh = 0
            rows_ref[r0:r0 + Hin - 1,
                     2 * band_pitch:2 * band_pitch + WCin] = x[r0 + 1:r0 + Hin, :]  # kh = 2

        # ---- conv3x3(pad=1) * BN-scale as ONE banded matmul; + shift; ReLU -- #
        y = jnp.dot(rows_ref[...], wband_ref[...],
                    preferred_element_type=jnp.float32)       # (Nb*Hin, WCout)
        y = jnp.maximum(y + shift_ref[...], 0.0)

        # ---- bilinear resize (align_corners=True) + 1x1 conv ---------------- #
        # width interp + conv2 weight first (small intermediate), then per-image
        # row interp via the block-diagonal rhB; conv2 bias added at the end.
        yw = jnp.dot(y, rwcT_ref[...],
                     preferred_element_type=jnp.float32)      # (Nb*Hin, Wout)
        out = jnp.dot(rhB_ref[...], yw,
                      preferred_element_type=jnp.float32)     # (Nb*Hout, Wout)
        o_ref[...] = out + b2_ref[0, 0]

    return pl.pallas_call(
        kernel,
        out_shape=jax.ShapeDtypeStruct((n_blk * Nb * Hout, Wout), jnp.float32),
        grid=(n_blk,),
        in_specs=[
            pl.BlockSpec((Nb * Hin, WCin), lambda b: (b, 0)),
            pl.BlockSpec((Kband, WCout), lambda b: (0, 0)),
            pl.BlockSpec((1, WCout), lambda b: (0, 0)),
            pl.BlockSpec((WCout, Wout), lambda b: (0, 0)),
            pl.BlockSpec((Nb * Hout, Nb * Hin), lambda b: (0, 0)),
            pl.BlockSpec(memory_space=pltpu.MemorySpace.SMEM),   # b2 scalar
        ],
        out_specs=pl.BlockSpec((Nb * Hout, Wout), lambda b: (b, 0)),
        scratch_shapes=[pltpu.VMEM((Nb * Hin, Kband), jnp.float32)],
        compiler_params=pltpu.CompilerParams(
            dimension_semantics=("arbitrary",)),   # sequential: scratch init-once
    )(x2d, wband, shift_w, rwcT, rhB, b2)


# --------------------------------------------------------------------------- #
# Glue: one-time, weight-only preprocessing
# --------------------------------------------------------------------------- #
def bilinear_matrix(out_size, in_size):
    """Row-stochastic interpolation matrix for align_corners=True bilinear."""
    if out_size == 1:
        src = jnp.zeros((1,), jnp.float32)
    else:
        src = jnp.arange(out_size, dtype=jnp.float32) * (
            (in_size - 1) / (out_size - 1))
    i0 = jnp.clip(jnp.floor(src).astype(jnp.int32), 0, in_size - 1)
    i1 = jnp.clip(i0 + 1, 0, in_size - 1)
    frac = src - i0.astype(jnp.float32)
    return (jax.nn.one_hot(i0, in_size, dtype=jnp.float32) * (1.0 - frac)[:, None]
            + jax.nn.one_hot(i1, in_size, dtype=jnp.float32) * frac[:, None])


def build_band_weight(w1, Win, Cin, Cout, band_pitch):
    """Banded conv3x3 weight (3*band_pitch, Win*Cout) such that
    rows @ wband == conv3x3(x, w1, padding=1) flattened over (w, cout), where
    rows[h, kh*band_pitch + ww*Cin + ci] = x[h+kh-1, ww, ci] (zero at borders).
    Width-border taps are dropped (zero padding) via the placement matrix; the
    alignment-pad lanes (ww*Cin+ci >= Win*Cin) get zero weight rows."""
    WCin, WCout = Win * Cin, Win * Cout
    bands = []
    for kh in range(3):
        band = jnp.zeros((WCin, WCout), jnp.float32)
        for kw in range(3):
            ww = jnp.arange(Win) + (kw - 1)                  # source w for each output w
            valid = ((ww >= 0) & (ww < Win)).astype(jnp.float32)
            oh = jax.nn.one_hot(jnp.clip(ww, 0, Win - 1), Win,
                                dtype=jnp.float32)           # (Win_out, Win_src)
            placement = (oh * valid[:, None]).T              # (Win_src, Win_out)
            band = band + jnp.kron(placement, w1[kh, kw])    # (Win*Cin, Win*Cout)
        band = jnp.pad(band, ((0, band_pitch - WCin), (0, 0)))
        bands.append(band)
    return jnp.concatenate(bands, axis=0)                    # (3*band_pitch, WCout)


def out_block_forward(x_nchw, H_out, W_out, w1, scale, shift, w2, b2, *, Nb=None):
    """x_nchw: (N, Cin, Hin, Win); w1: HWIO (3,3,Cin,64); scale/shift: folded
    eval-mode BN (per-channel); w2: (64,) 1x1-conv weight; b2: () bias.
    Returns (N, 1, H_out, W_out), matching the PyTorch module."""
    N, Cin, Hin, Win = x_nchw.shape
    Cout = w1.shape[-1]
    WCin, WCout = Win * Cin, Win * Cout
    LANE = 128
    band_pitch = ((WCin + LANE - 1) // LANE) * LANE          # 128-aligned band start

    if Nb is None:
        Nb = min(N, 8)                                       # images per grid step
    n_blk = -(-N // Nb)
    N_pad = n_blk * Nb

    # NCHW -> NHWC -> batch stacked along rows: (N_pad*Hin, Win*Cin)
    x2d = jnp.transpose(x_nchw, (0, 2, 3, 1)).astype(jnp.float32).reshape(
        N, Hin, WCin)
    if N_pad != N:
        x2d = jnp.concatenate(
            [x2d, jnp.zeros((N_pad - N, Hin, WCin), jnp.float32)], axis=0)
    x2d = x2d.reshape(N_pad * Hin, WCin)

    # banded conv3x3 weight with the BN scale folded into its columns
    scale_w = jnp.tile(scale.reshape(Cout).astype(jnp.float32), Win)          # (WCout,)
    shift_w = jnp.tile(shift.reshape(Cout).astype(jnp.float32), Win)[None, :]  # (1, WCout)
    wband = build_band_weight(w1.astype(jnp.float32), Win, Cin, Cout,
                              band_pitch) * scale_w[None, :]

    # resize matrices (align_corners=True); conv2 weight folded into rwcT
    rh = bilinear_matrix(H_out, Hin)                          # (Hout, Hin)
    rw = bilinear_matrix(W_out, Win)                          # (Wout, Win)
    rwcT = (rw.T[:, None, :] *
            w2.reshape(Cout).astype(jnp.float32)[None, :, None]
            ).reshape(WCout, W_out)                           # (WCout, Wout)
    rhB = jnp.kron(jnp.eye(Nb, dtype=jnp.float32), rh)        # (Nb*Hout, Nb*Hin)

    o = out_block_pallas(x2d, wband, shift_w, rwcT, rhB,
                         jnp.asarray(b2, jnp.float32).reshape(1, 1),
                         Nb=Nb, Hin=Hin, Hout=H_out, Wout=W_out,
                         WCin=WCin, WCout=WCout, band_pitch=band_pitch)
    o = o.reshape(N_pad, H_out, W_out)[:N]                    # drop batch padding
    return o[:, None, :, :]                                   # (N, 1, Hout, Wout)


# --------------------------------------------------------------------------- #
# Pure-JAX reference (for a loose correctness check in __main__)
# --------------------------------------------------------------------------- #
def reference_forward(x_nchw, H_out, W_out, w1, scale, shift, w2, b2):
    y = jax.lax.conv_general_dilated(
        x_nchw.astype(jnp.float32), w1.astype(jnp.float32),
        window_strides=(1, 1), padding=((1, 1), (1, 1)),
        dimension_numbers=("NCHW", "HWIO", "NCHW"))
    y = y * scale.reshape(1, -1, 1, 1) + shift.reshape(1, -1, 1, 1)
    y = jnp.maximum(y, 0.0)
    rh = bilinear_matrix(H_out, y.shape[2])
    rw = bilinear_matrix(W_out, y.shape[3])
    y = jnp.einsum('oh,nchw,pw->ncop', rh, y, rw)
    return jnp.einsum('ncop,c->nop', y, w2)[:, None, :, :] + b2


# --------------------------------------------------------------------------- #
if __name__ == "__main__":
    key = jax.random.PRNGKey(0)
    k1, k2, k3, k4, k5, k6 = jax.random.split(key, 6)

    infilter = 4
    N, H_in, W_in = 2, 16, 16
    H_out, W_out = 32, 32

    x_nchw = jax.random.normal(k1, (N, infilter, H_in, W_in), jnp.float32)

    # conv1 weight: PyTorch (64, infilter, 3, 3) -> HWIO (3, 3, infilter, 64)
    w1 = 0.1 * jax.random.normal(k2, (3, 3, infilter, 64), jnp.float32)

    # BatchNorm2d(64), eval mode: fold (gamma, beta, running stats) into scale/shift
    gamma = 1.0 + 0.01 * jax.random.normal(k3, (64,), jnp.float32)
    beta = 0.01 * jax.random.normal(k4, (64,), jnp.float32)
    running_mean = jnp.zeros((64,), jnp.float32)
    running_var = jnp.ones((64,), jnp.float32)
    eps = 1e-5
    inv_std = 1.0 / jnp.sqrt(running_var + eps)
    scale = (gamma * inv_std).reshape(1, 64)
    shift = (beta - running_mean * gamma * inv_std).reshape(1, 64)

    # conv2: 1x1 conv, PyTorch weight (1, 64, 1, 1) -> (64,); bias () scalar
    w2 = 0.1 * jax.random.normal(k5, (64,), jnp.float32)
    b2 = 0.01 * jax.random.normal(k6, (), jnp.float32)

    out = out_block_forward(x_nchw, H_out, W_out, w1, scale, shift, w2, b2)
    out = jax.block_until_ready(out)
    assert out.shape == (N, 1, H_out, W_out), out.shape

    ref = jax.block_until_ready(
        reference_forward(x_nchw, H_out, W_out, w1, scale, shift, w2, b2))
    max_err = float(jnp.max(jnp.abs(out - ref)))
    assert max_err < 2e-3, f"max abs err vs reference: {max_err}"

    print("KERNEL_OK")
</pallas_src>

<mosaic_0001>
module attributes {stable_mosaic.version = 11 : i64} {
  func.func @kernel(%arg0: i32, %arg1: memref<32x64xf32, #tpu.memory_space<vmem>>, %arg2: memref<384x1024xf32, #tpu.memory_space<vmem>>, %arg3: memref<1x1024xf32, #tpu.memory_space<vmem>>, %arg4: memref<1024x32xf32, #tpu.memory_space<vmem>>, %arg5: memref<64x32xf32, #tpu.memory_space<vmem>>, %arg6: memref<1x1xf32, #tpu.memory_space<smem>>, %arg7: memref<64x32xf32, #tpu.memory_space<vmem>>, %arg8: memref<32x384xf32, #tpu.memory_space<vmem>>) attributes {dimension_semantics = [#tpu.dimension_semantics<arbitrary>], iteration_bounds = array<i64: 1>, scalar_prefetch = 0 : i64, scratch_operands = 1 : i64, tpu.core_type = #tpu.core_type<tc>, window_params = [{transform_indices = @transform_0, window_bounds = array<i64: 32, 64>}, {pipeline_mode = #tpu.pipeline_mode<synchronous>, transform_indices = @transform_1, window_bounds = array<i64: 384, 1024>}, {pipeline_mode = #tpu.pipeline_mode<synchronous>, transform_indices = @transform_2, window_bounds = array<i64: 1, 1024>}, {pipeline_mode = #tpu.pipeline_mode<synchronous>, transform_indices = @transform_3, window_bounds = array<i64: 1024, 32>}, {pipeline_mode = #tpu.pipeline_mode<synchronous>, transform_indices = @transform_4, window_bounds = array<i64: 64, 32>}, {transform_indices = @transform_5, window_bounds = array<i64: 1, 1>}, {transform_indices = @transform_6, window_bounds = array<i64: 64, 32>}]} {
    %c0_i32 = arith.constant 0 : i32
    %0 = arith.cmpi eq, %arg0, %c0_i32 : i32
    %1 = arith.extui %0 : i1 to i32
    %c0_i32_0 = arith.constant 0 : i32
    %2 = arith.cmpi ne, %1, %c0_i32_0 : i32
    scf.if %2 {
      %cst_24 = arith.constant 0.000000e+00 : f32
      %29 = vector.broadcast %cst_24 : f32 to vector<32x384xf32>
      %c0_25 = arith.constant 0 : index
      %c0_26 = arith.constant 0 : index
      %30 = vector.load %arg8[%c0_25, %c0_26] : memref<32x384xf32, #tpu.memory_space<vmem>>, vector<32x384xf32>
      tpu.vector_store %arg8[%c0_25, %c0_26], %29 {strides = array<i32>} : memref<32x384xf32, #tpu.memory_space<vmem>>, vector<32x384xf32>,
    } else {
    }
    %c0 = arith.constant 0 : index
    %c0_1 = arith.constant 0 : index
    %3 = vector.load %arg1[%c0, %c0_1] : memref<32x64xf32, #tpu.memory_space<vmem>>, vector<32x64xf32>
    %c0_2 = arith.constant 0 : index
    %c128 = arith.constant 128 : index
    %4 = vector.load %arg8[%c0_2, %c128] : memref<32x384xf32, #tpu.memory_space<vmem>>, vector<32x64xf32>
    tpu.vector_store %arg8[%c0_2, %c128], %3 {strides = array<i32>} : memref<32x384xf32, #tpu.memory_space<vmem>>, vector<32x64xf32>,
    %5 = vector.extract_strided_slice %3 {offsets = [0, 0], sizes = [15, 64], strides = [1, 1]} : vector<32x64xf32> to vector<15x64xf32>
    %c1 = arith.constant 1 : index
    %c0_3 = arith.constant 0 : index
    %6 = vector.load %arg8[%c1, %c0_3] : memref<32x384xf32, #tpu.memory_space<vmem>>, vector<15x64xf32>
    tpu.vector_store %arg8[%c1, %c0_3], %5 {strides = array<i32>} : memref<32x384xf32, #tpu.memory_space<vmem>>, vector<15x64xf32>,
    %7 = vector.extract_strided_slice %3 {offsets = [1, 0], sizes = [15, 64], strides = [1, 1]} : vector<32x64xf32> to vector<15x64xf32>
    %c0_4 = arith.constant 0 : index
    %c256 = arith.constant 256 : index
    %8 = vector.load %arg8[%c0_4, %c256] : memref<32x384xf32, #tpu.memory_space<vmem>>, vector<15x64xf32>
    tpu.vector_store %arg8[%c0_4, %c256], %7 {strides = array<i32>} : memref<32x384xf32, #tpu.memory_space<vmem>>, vector<15x64xf32>,
    %9 = vector.extract_strided_slice %3 {offsets = [16, 0], sizes = [15, 64], strides = [1, 1]} : vector<32x64xf32> to vector<15x64xf32>
    %c17 = arith.constant 17 : index
    %c0_5 = arith.constant 0 : index
    %10 = vector.load %arg8[%c17, %c0_5] : memref<32x384xf32, #tpu.memory_space<vmem>>, vector<15x64xf32>
    tpu.vector_store %arg8[%c17, %c0_5], %9 {strides = array<i32>} : memref<32x384xf32, #tpu.memory_space<vmem>>, vector<15x64xf32>,
    %11 = vector.extract_strided_slice %3 {offsets = [17, 0], sizes = [15, 64], strides = [1, 1]} : vector<32x64xf32> to vector<15x64xf32>
    %c16 = arith.constant 16 : index
    %c256_6 = arith.constant 256 : index
    %12 = vector.load %arg8[%c16, %c256_6] : memref<32x384xf32, #tpu.memory_space<vmem>>, vector<15x64xf32>
    tpu.vector_store %arg8[%c16, %c256_6], %11 {strides = array<i32>} : memref<32x384xf32, #tpu.memory_space<vmem>>, vector<15x64xf32>,
    %c0_7 = arith.constant 0 : index
    %c0_8 = arith.constant 0 : index
    %13 = vector.load %arg8[%c0_7, %c0_8] : memref<32x384xf32, #tpu.memory_space<vmem>>, vector<32x384xf32>
    %c0_9 = arith.constant 0 : index
    %c0_10 = arith.constant 0 : index
    %14 = vector.load %arg2[%c0_9, %c0_10] : memref<384x1024xf32, #tpu.memory_space<vmem>>, vector<384x1024xf32>
    %cst = arith.constant dense<0.000000e+00> : vector<32x1024xf32>
    %15 = tpu.matmul %13, %14, %cst {dimension_numbers = #tpu.dot_dimension_numbers<[1], [0], [0], [1], [0, 0, 1, 1], [], []>} : vector<32x384xf32>, vector<384x1024xf32>, vector<32x1024xf32> -> vector<32x1024xf32>
    %c0_11 = arith.constant 0 : index
    %c0_12 = arith.constant 0 : index
    %16 = vector.load %arg3[%c0_11, %c0_12] : memref<1x1024xf32, #tpu.memory_space<vmem>>, vector<1x1024xf32>
    %17 = vector.broadcast %16 : vector<1x1024xf32> to vector<32x1024xf32>
    %18 = arith.addf %15, %17 : vector<32x1024xf32>
    %cst_13 = arith.constant 0.000000e+00 : f32
    %19 = vector.broadcast %cst_13 : f32 to vector<32x1024xf32>
    %20 = arith.maximumf %18, %19 : vector<32x1024xf32>
    %c0_14 = arith.constant 0 : index
    %c0_15 = arith.constant 0 : index
    %21 = vector.load %arg4[%c0_14, %c0_15] : memref<1024x32xf32, #tpu.memory_space<vmem>>, vector<1024x32xf32>
    %cst_16 = arith.constant dense<0.000000e+00> : vector<32x32xf32>
    %22 = tpu.matmul %20, %21, %cst_16 {dimension_numbers = #tpu.dot_dimension_numbers<[1], [0], [0], [1], [0, 0, 1, 1], [], []>} : vector<32x1024xf32>, vector<1024x32xf32>, vector<32x32xf32> -> vector<32x32xf32>
    %c0_17 = arith.constant 0 : index
    %c0_18 = arith.constant 0 : index
    %23 = vector.load %arg5[%c0_17, %c0_18] : memref<64x32xf32, #tpu.memory_space<vmem>>, vector<64x32xf32>
    %cst_19 = arith.constant dense<0.000000e+00> : vector<64x32xf32>
    %24 = tpu.matmul %23, %22, %cst_19 {dimension_numbers = #tpu.dot_dimension_numbers<[1], [0], [0], [1], [0, 0, 1, 1], [], []>} : vector<64x32xf32>, vector<32x32xf32>, vector<64x32xf32> -> vector<64x32xf32>
    %c0_20 = arith.constant 0 : index
    %c0_21 = arith.constant 0 : index
    %25 = memref.load %arg6[%c0_20, %c0_21] : memref<1x1xf32, #tpu.memory_space<smem>>
    %26 = vector.broadcast %25 : f32 to vector<64x32xf32>
    %27 = arith.addf %24, %26 : vector<64x32xf32>
    %c0_22 = arith.constant 0 : index
    %c0_23 = arith.constant 0 : index
    %28 = vector.load %arg7[%c0_22, %c0_23] : memref<64x32xf32, #tpu.memory_space<vmem>>, vector<64x32xf32>
    tpu.vector_store %arg7[%c0_22, %c0_23], %27 {strides = array<i32>} : memref<64x32xf32, #tpu.memory_space<vmem>>, vector<64x32xf32>,
    return
  }
  func.func @transform_0(%arg0: i32) -> (i32, i32) {
    %c0_i32 = arith.constant 0 : i32
    %c0_i32_0 = arith.constant 0 : i32
    return %arg0, %c0_i32 : i32, i32
  }
  func.func @transform_1(%arg0: i32) -> (i32, i32) {
    %c0_i32 = arith.constant 0 : i32
    %c0_i32_0 = arith.constant 0 : i32
    %c0_i32_1 = arith.constant 0 : i32
    return %c0_i32, %c0_i32_0 : i32, i32
  }
  func.func @transform_2(%arg0: i32) -> (i32, i32) {
    %c0_i32 = arith.constant 0 : i32
    %c0_i32_0 = arith.constant 0 : i32
    %c0_i32_1 = arith.constant 0 : i32
    return %c0_i32, %c0_i32_0 : i32, i32
  }
  func.func @transform_3(%arg0: i32) -> (i32, i32) {
    %c0_i32 = arith.constant 0 : i32
    %c0_i32_0 = arith.constant 0 : i32
    %c0_i32_1 = arith.constant 0 : i32
    return %c0_i32, %c0_i32_0 : i32, i32
  }
  func.func @transform_4(%arg0: i32) -> (i32, i32) {
    %c0_i32 = arith.constant 0 : i32
    %c0_i32_0 = arith.constant 0 : i32
    %c0_i32_1 = arith.constant 0 : i32
    return %c0_i32, %c0_i32_0 : i32, i32
  }
  func.func @transform_5(%arg0: i32) -> (i32, i32) {
    %c0_i32 = arith.constant 0 : i32
    %c0_i32_0 = arith.constant 0 : i32
    %c0_i32_1 = arith.constant 0 : i32
    return %c0_i32, %c0_i32_0 : i32, i32
  }
  func.func @transform_6(%arg0: i32) -> (i32, i32) {
    %c0_i32 = arith.constant 0 : i32
    %c0_i32_0 = arith.constant 0 : i32
    return %arg0, %c0_i32 : i32, i32
  }
}

</mosaic_0001>

<llo_original>
// kernel: tpu_custom_call.1
$region0: #{tpu_custom_call.1}
  #allocation0 [shape = 'u32[]', space=smem, size = 0x4, offset = 0x4, fixed_abs, tag = 'smem constant byte address 0x4 - core index']
  #allocation1 [shape = 'u32[144,128]{1,0:T(1,128)}', space=vmem, size = 0x12000, scoped, tag = 'internal scratch']
  #allocation2 [shape = 'f32[32,384]{1,0:T(8,128)}', space=vmem, size = 0xc000, scoped, tag = 'scratch operand']
  #allocation3 [shape = 'f32[1,1]{1,0:T(1,128)S(6)}', space=smem, size = 0x200, scoped, tag = 'scoped memory for tpu_custom_call.1']
  %s0 = inlined_call_operand.hbm [shape: f32[32,64], index: 0, kind: input, shape index: {}]
  %s1 = inlined_call_operand.hbm [shape: f32[384,1024], index: 1, kind: input, shape index: {}]
  %s2 = inlined_call_operand.hbm [shape: f32[1,1024], index: 2, kind: input, shape index: {}]
  %s3 = inlined_call_operand.vmem [shape: f32[1024,32], index: 3, kind: input, shape index: {}]
  %s4 = inlined_call_operand.vmem [shape: f32[64,32], index: 4, kind: input, shape index: {}]
  %s5 = inlined_call_operand.<no memory space> [shape: f32[1,1], index: 5, kind: input, shape index: {}]
  %s6 = inlined_call_operand.vmem [shape: f32[64,32], index: 6, kind: output, shape index: {}]
  %s7 = sld [smem:[#allocation0]]
  $region50: #{tpu_custom_call.1} parent=0
    _
  %s9 = ssub.s32 1, %s7
  %s10 = scalar_select 0, %s9, %s7
  %11 = sst [smem:[#allocation3]] %s5
  $region1: #{tpu_custom_call.1} parent=0
    #allocation4 [shape = 'u8[16384]{0}', space=vmem, size = 0x4000, scoped, tag = 'input window, operand 0, single buffered']
    #allocation5 [shape = 's32[1]{0}', space=sflag, size = 0x4, scoped, tag = 'scoped memory for tpu_custom_call.1']
    #allocation6 [shape = 'u8[1572864]{0}', space=vmem, size = 0x180000, scoped, tag = 'input window, operand 1, single buffered']
    #allocation7 [shape = 's32[1]{0}', space=sflag, size = 0x4, scoped, tag = 'scoped memory for tpu_custom_call.1']
    #allocation8 [shape = 'u8[4096]{0}', space=vmem, size = 0x1000, scoped, tag = 'input window, operand 2, single buffered']
    %12 = vsyncpa [#allocation5], 0
    %13 = vsyncpa [#allocation7], 0
    // Predicated region
    $region2: #{tpu_custom_call.1} parent=1 // pred_check
      _
    $region3: #{tpu_custom_call.1} parent=1 // pred_check_branch
      %15 = sbr.rel (0) target = $region5
    $region4: #{tpu_custom_call.1} parent=1 // pred_region
      %s17 = ssub.s32 512, 512
      %18 = vsyncadd [#allocation5], %s17
      %s19 = sshll.u32 [#allocation4], 4
      %s20 = int_to_ptr.vmem [resolvable:$true] %s19
      %25 = dma.hbm_to_vmem [thread:$0]  %s0, 512, %s20, [#allocation5], 128, 128, 8
    $region5: #{tpu_custom_call.1} parent=1 // pred_fallthru
      _
    // Predicated region
    $region6: #{tpu_custom_call.1} parent=1 // pred_check
      _
    $region7: #{tpu_custom_call.1} parent=1 // pred_check_branch
      %27 = sbr.rel (0) target = $region9
    $region8: #{tpu_custom_call.1} parent=1 // pred_region
      %s29 = ssub.s32 49152, 49152
      %30 = vsyncadd [#allocation7], %s29
      %s31 = sshll.u32 [#allocation6], 4
      %s32 = int_to_ptr.vmem [resolvable:$true] %s31
      %37 = dma.hbm_to_vmem [thread:$0]  %s1, 49152, %s32, [#allocation7], 1024, 1024, 64
    $region9: #{tpu_custom_call.1} parent=1 // pred_fallthru
      _
    // Predicated region
    $region10: #{tpu_custom_call.1} parent=1 // pred_check
      _
    $region11: #{tpu_custom_call.1} parent=1 // pred_check_branch
      %39 = sbr.rel (0) target = $region13
    $region12: #{tpu_custom_call.1} parent=1 // pred_region
      %s41 = ssub.s32 128, 128
      %42 = vsyncadd [#allocation7], %s41
      %s44 = sshll.u32 [#allocation8], 4
      %s45 = int_to_ptr.vmem [resolvable:$true] %s44
      %47 = dma.hbm_to_vmem [thread:$0]  %s2, 128, %s45, [#allocation7]
    $region13: #{tpu_custom_call.1} parent=1 // pred_fallthru
      _
    // Predicated region
    $region14: #{tpu_custom_call.1} parent=1 // pred_check
      _
    $region15: #{tpu_custom_call.1} parent=1 // pred_check_branch
      %49 = sbr.rel (0) target = $region17
    $region16: #{tpu_custom_call.1} parent=1 // pred_region
      _
    $region17: #{tpu_custom_call.1} parent=1 // pred_fallthru
      _
    // Predicated region
    $region18: #{tpu_custom_call.1} parent=1 // pred_check
      _
    $region19: #{tpu_custom_call.1} parent=1 // pred_check_branch
      %51 = sbr.rel (0) target = $region21
    $region20: #{tpu_custom_call.1} parent=1 // pred_region
      _
    $region21: #{tpu_custom_call.1} parent=1 // pred_fallthru
      _
    // Predicated region
    $region22: #{tpu_custom_call.1} parent=1 // pred_check
      _
    $region23: #{tpu_custom_call.1} parent=1 // pred_check_branch
      %53 = sbr.rel (0) target = $region25
    $region24: #{tpu_custom_call.1} parent=1 // pred_region
      _
    $region25: #{tpu_custom_call.1} parent=1 // pred_fallthru
      _
    // Predicated region
    $region26: #{tpu_custom_call.1} parent=1 // pred_check
      _
    $region27: #{tpu_custom_call.1} parent=1 // pred_check_branch
      %55 = sbr.rel (0) target = $region29
    $region28: #{tpu_custom_call.1} parent=1 // pred_region
      %56 = dma.done [#allocation5], 512
    $region29: #{tpu_custom_call.1} parent=1 // pred_fallthru
      _
    // Predicated region
    $region30: #{tpu_custom_call.1} parent=1 // pred_check
      _
    $region31: #{tpu_custom_call.1} parent=1 // pred_check_branch
      %58 = sbr.rel (0) target = $region33
    $region32: #{tpu_custom_call.1} parent=1 // pred_region
      %59 = dma.done [#allocation7], 49152
    $region33: #{tpu_custom_call.1} parent=1 // pred_fallthru
      _
    // Predicated region
    $region34: #{tpu_custom_call.1} parent=1 // pred_check
      _
    $region35: #{tpu_custom_call.1} parent=1 // pred_check_branch
      %61 = sbr.rel (0) target = $region37
    $region36: #{tpu_custom_call.1} parent=1 // pred_region
      %62 = dma.done [#allocation7], 128
    $region37: #{tpu_custom_call.1} parent=1 // pred_fallthru
      _
    %p63 = scmp.eq.s32.totalorder 0, 0
    // Predicated region
    $region38: #{tpu_custom_call.1} parent=1 // pred_check
      %p64 = pneg %p63
    $region39: #{tpu_custom_call.1} parent=1 // pred_check_branch
      %66 = sbr.rel (%p64) target = $region41
    $region40: #{tpu_custom_call.1} parent=1 // pred_region
      %67 = vst [vmem:[#allocation2] sm:$0xff] 0.0
      %68 = vst [vmem:[#allocation2 + $0x8] sm:$0xff] 0.0
      %69 = vst [vmem:[#allocation2 + $0x10] sm:$0xff] 0.0
      %70 = vst [vmem:[#allocation2 + $0x18] sm:$0xff] 0.0
      %71 = vst [vmem:[#allocation2 + $0x20] sm:$0xff] 0.0
      %72 = vst [vmem:[#allocation2 + $0x28] sm:$0xff] 0.0
      %73 = vst [vmem:[#allocation2 + $0x30] sm:$0xff] 0.0
      %74 = vst [vmem:[#allocation2 + $0x38] sm:$0xff] 0.0
      %75 = vst [vmem:[#allocation2 + $0x40] sm:$0xff] 0.0
      %76 = vst [vmem:[#allocation2 + $0x48] sm:$0xff] 0.0
      %77 = vst [vmem:[#allocation2 + $0x50] sm:$0xff] 0.0
      %78 = vst [vmem:[#allocation2 + $0x58] sm:$0xff] 0.0
    $region41: #{tpu_custom_call.1} parent=1 // pred_fallthru
      _
    %v79 = vld [vmem:[#allocation4] sm:$0xff]
    %v80 = vld [vmem:[#allocation4 + $0x8] sm:$0xff]
    %v81 = vld [vmem:[#allocation4 + $0x10] sm:$0xff]
    %v82 = vld [vmem:[#allocation4 + $0x18] sm:$0xff]
    %vm83 = vcmask 523264
    %84 = vst.msk [vmem:[#allocation2 + $0x8] sm:$0xff] %vm83, %v79
    %85 = vst.msk [vmem:[#allocation2 + $0x20] sm:$0xff] %vm83, %v80
    %86 = vst.msk [vmem:[#allocation2 + $0x38] sm:$0xff] %vm83, %v81
    %87 = vst.msk [vmem:[#allocation2 + $0x50] sm:$0xff] %vm83, %v82
    %vm90 = vcmask 1040384
    %v91 = vrot.slane %v79, 7
    %v92 = vrot.slane %v80, 7
    %v93 = vsel %vm90, %v91, %v92
    %vm96 = vcmask 523265
    %97 = vst.msk [vmem:[#allocation2] sm:$0xfe] %vm96, %v91
    %98 = vst.msk [vmem:[#allocation2 + $0x18] sm:$0xff] %vm83, %v93
    %vm99 = vcmask 1046528
    %v100 = vrot.slane %v79, 1
    %v101 = vrot.slane %v80, 1
    %v102 = vsel %vm99, %v100, %v101
    %105 = vst.msk [vmem:[#allocation2 + $0x10] sm:$0xff] %vm83, %v102
    %vm106 = vcmask 522240
    %107 = vst.msk [vmem:[#allocation2 + $0x28] sm:$0x7f] %vm106, %v101
    %v110 = vrot.slane %v81, 7
    %v111 = vrot.slane %v82, 7
    %v112 = vsel %vm90, %v110, %v111
    %115 = vst.msk [vmem:[#allocation2 + $0x30] sm:$0xfe] %vm96, %v110
    %116 = vst.msk [vmem:[#allocation2 + $0x48] sm:$0xff] %vm83, %v112
    %v117 = vrot.slane %v81, 1
    %v118 = vrot.slane %v82, 1
    %v119 = vsel %vm99, %v117, %v118
    %122 = vst.msk [vmem:[#allocation2 + $0x40] sm:$0xff] %vm83, %v119
    %123 = vst.msk [vmem:[#allocation2 + $0x58] sm:$0x7f] %vm106, %v118
    %v124 = vld [vmem:[#allocation2] sm:$0xff]
    %v125 = vld [vmem:[#allocation2 + $0x8] sm:$0xff]
    %v126 = vld [vmem:[#allocation2 + $0x10] sm:$0xff]
    %v127 = vld [vmem:[#allocation2 + $0x18] sm:$0xff]
    %v128 = vld [vmem:[#allocation2 + $0x20] sm:$0xff]
    %v129 = vld [vmem:[#allocation2 + $0x28] sm:$0xff]
    %v130 = vld [vmem:[#allocation2 + $0x30] sm:$0xff]
    %v131 = vld [vmem:[#allocation2 + $0x38] sm:$0xff]
    %v132 = vld [vmem:[#allocation2 + $0x40] sm:$0xff]
    %v133 = vld [vmem:[#allocation2 + $0x48] sm:$0xff]
    %v134 = vld [vmem:[#allocation2 + $0x50] sm:$0xff]
    %v135 = vld [vmem:[#allocation2 + $0x58] sm:$0xff]
    %v136 = vld [vmem:[#allocation6] sm:$0xff]
    %v137 = vld [vmem:[#allocation6 + $0x8] sm:$0xff]
    %v138 = vld [vmem:[#allocation6 + $0x10] sm:$0xff]
    %v139 = vld [vmem:[#allocation6 + $0x18] sm:$0xff]
    %v140 = vld [vmem:[#allocation6 + $0x20] sm:$0xff]
    %v141 = vld [vmem:[#allocation6 + $0x28] sm:$0xff]
    %v142 = vld [vmem:[#allocation6 + $0x30] sm:$0xff]
    %v143 = vld [vmem:[#allocation6 + $0x38] sm:$0xff]
    %v144 = vld [vmem:[#allocation6 + $0x40] sm:$0xff]
    %v145 = vld [vmem:[#allocation6 + $0x48] sm:$0xff]
    %v146 = vld [vmem:[#allocation6 + $0x50] sm:$0xff]
    %v147 = vld [vmem:[#allocation6 + $0x58] sm:$0xff]
    %v148 = vld [vmem:[#allocation6 + $0x60] sm:$0xff]
    %v149 = vld [vmem:[#allocation6 + $0x68] sm:$0xff]
    %v150 = vld [vmem:[#allocation6 + $0x70] sm:$0xff]
    %v151 = vld [vmem:[#allocation6 + $0x78] sm:$0xff]
    %v152 = vld [vmem:[#allocation6 + $0x80] sm:$0xff]
    %v153 = vld [vmem:[#allocation6 + $0x88] sm:$0xff]
    %v154 = vld [vmem:[#allocation6 + $0x90] sm:$0xff]
    %v155 = vld [vmem:[#allocation6 + $0x98] sm:$0xff]
    %v156 = vld [vmem:[#allocation6 + $0xa0] sm:$0xff]
    %v157 = vld [vmem:[#allocation6 + $0xa8] sm:$0xff]
    %v158 = vld [vmem:[#allocation6 + $0xb0] sm:$0xff]
    %v159 = vld [vmem:[#allocation6 + $0xb8] sm:$0xff]
    %v160 = vld [vmem:[#allocation6 + $0xc0] sm:$0xff]
    %v161 = vld [vmem:[#allocation6 + $0xc8] sm:$0xff]
    %v162 = vld [vmem:[#allocation6 + $0xd0] sm:$0xff]
    %v163 = vld [vmem:[#allocation6 + $0xd8] sm:$0xff]
    %v164 = vld [vmem:[#allocation6 + $0xe0] sm:$0xff]
    %v165 = vld [vmem:[#allocation6 + $0xe8] sm:$0xff]
    %v166 = vld [vmem:[#allocation6 + $0xf0] sm:$0xff]
    %v167 = vld [vmem:[#allocation6 + $0xf8] sm:$0xff]
    %v168 = vld [vmem:[#allocation6 + $0x100] sm:$0xff]
    %v169 = vld [vmem:[#allocation6 + $0x108] sm:$0xff]
    %v170 = vld [vmem:[#allocation6 + $0x110] sm:$0xff]
    %v171 = vld [vmem:[#allocation6 + $0x118] sm:$0xff]
    %v172 = vld [vmem:[#allocation6 + $0x120] sm:$0xff]
    %v173 = vld [vmem:[#allocation6 + $0x128] sm:$0xff]
    %v174 = vld [vmem:[#allocation6 + $0x130] sm:$0xff]
    %v175 = vld [vmem:[#allocation6 + $0x138] sm:$0xff]
    %v176 = vld [vmem:[#allocation6 + $0x140] sm:$0xff]
    %v177 = vld [vmem:[#allocation6 + $0x148] sm:$0xff]
    %v178 = vld [vmem:[#allocation6 + $0x150] sm:$0xff]
    %v179 = vld [vmem:[#allocation6 + $0x158] sm:$0xff]
    %v180 = vld [vmem:[#allocation6 + $0x160] sm:$0xff]
    %v181 = vld [vmem:[#allocation6 + $0x168] sm:$0xff]
    %v182 = vld [vmem:[#allocation6 + $0x170] sm:$0xff]
    %v183 = vld [vmem:[#allocation6 + $0x178] sm:$0xff]
    %v184 = vld [vmem:[#allocation6 + $0x180] sm:$0xff]
    %v185 = vld [vmem:[#allocation6 + $0x188] sm:$0xff]
    %v186 = vld [vmem:[#allocation6 + $0x190] sm:$0xff]
    %v187 = vld [vmem:[#allocation6 + $0x198] sm:$0xff]
    %v188 = vld [vmem:[#allocation6 + $0x1a0] sm:$0xff]
    %v189 = vld [vmem:[#allocation6 + $0x1a8] sm:$0xff]
    %v190 = vld [vmem:[#allocation6 + $0x1b0] sm:$0xff]
    %v191 = vld [vmem:[#allocation6 + $0x1b8] sm:$0xff]
    %v192 = vld [vmem:[#allocation6 + $0x1c0] sm:$0xff]
    %v193 = vld [vmem:[#allocation6 + $0x1c8] sm:$0xff]
    %v194 = vld [vmem:[#allocation6 + $0x1d0] sm:$0xff]
    %v195 = vld [vmem:[#allocation6 + $0x1d8] sm:$0xff]
    %v196 = vld [vmem:[#allocation6 + $0x1e0] sm:$0xff]
    %v197 = vld [vmem:[#allocation6 + $0x1e8] sm:$0xff]
    %v198 = vld [vmem:[#allocation6 + $0x1f0] sm:$0xff]
    %v199 = vld [vmem:[#allocation6 + $0x1f8] sm:$0xff]
    %v200 = vld [vmem:[#allocation6 + $0x200] sm:$0xff]
    %v201 = vld [vmem:[#allocation6 + $0x208] sm:$0xff]
    %v202 = vld [vmem:[#allocation6 + $0x210] sm:$0xff]
    %v203 = vld [vmem:[#allocation6 + $0x218] sm:$0xff]
    %v204 = vld [vmem:[#allocation6 + $0x220] sm:$0xff]
    %v205 = vld [vmem:[#allocation6 + $0x228] sm:$0xff]
    %v206 = vld [vmem:[#allocation6 + $0x230] sm:$0xff]
    %v207 = vld [vmem:[#allocation6 + $0x238] sm:$0xff]
    %v208 = vld [vmem:[#allocation6 + $0x240] sm:$0xff]
    %v209 = vld [vmem:[#allocation6 + $0x248] sm:$0xff]
    %v210 = vld [vmem:[#allocation6 + $0x250] sm:$0xff]
    %v211 = vld [vmem:[#allocation6 + $0x258] sm:$0xff]
    %v212 = vld [vmem:[#allocation6 + $0x260] sm:$0xff]
    %v213 = vld [vmem:[#allocation6 + $0x268] sm:$0xff]
    %v214 = vld [vmem:[#allocation6 + $0x270] sm:$0xff]
    %v215 = vld [vmem:[#allocation6 + $0x278] sm:$0xff]
    %v216 = vld [vmem:[#allocation6 + $0x280] sm:$0xff]
    %v217 = vld [vmem:[#allocation6 + $0x288] sm:$0xff]
    %v218 = vld [vmem:[#allocation6 + $0x290] sm:$0xff]
    %v219 = vld [vmem:[#allocation6 + $0x298] sm:$0xff]
    %v220 = vld [vmem:[#allocation6 + $0x2a0] sm:$0xff]
    %v221 = vld [vmem:[#allocation6 + $0x2a8] sm:$0xff]
    %v222 = vld [vmem:[#allocation6 + $0x2b0] sm:$0xff]
    %v223 = vld [vmem:[#allocation6 + $0x2b8] sm:$0xff]
    %v224 = vld [vmem:[#allocation6 + $0x2c0] sm:$0xff]
    %v225 = vld [vmem:[#allocation6 + $0x2c8] sm:$0xff]
    %v226 = vld [vmem:[#allocation6 + $0x2d0] sm:$0xff]
    %v227 = vld [vmem:[#allocation6 + $0x2d8] sm:$0xff]
    %v228 = vld [vmem:[#allocation6 + $0x2e0] sm:$0xff]
    %v229 = vld [vmem:[#allocation6 + $0x2e8] sm:$0xff]
    %v230 = vld [vmem:[#allocation6 + $0x2f0] sm:$0xff]
    %v231 = vld [vmem:[#allocation6 + $0x2f8] sm:$0xff]
    %v232 = vld [vmem:[#allocation6 + $0x300] sm:$0xff]
    %v233 = vld [vmem:[#allocation6 + $0x308] sm:$0xff]
    %v234 = vld [vmem:[#allocation6 + $0x310] sm:$0xff]
    %v235 = vld [vmem:[#allocation6 + $0x318] sm:$0xff]
    %v236 = vld [vmem:[#allocation6 + $0x320] sm:$0xff]
    %v237 = vld [vmem:[#allocation6 + $0x328] sm:$0xff]
    %v238 = vld [vmem:[#allocation6 + $0x330] sm:$0xff]
    %v239 = vld [vmem:[#allocation6 + $0x338] sm:$0xff]
    %v240 = vld [vmem:[#allocation6 + $0x340] sm:$0xff]
    %v241 = vld [vmem:[#allocation6 + $0x348] sm:$0xff]
    %v242 = vld [vmem:[#allocation6 + $0x350] sm:$0xff]
    %v243 = vld [vmem:[#allocation6 + $0x358] sm:$0xff]
    %v244 = vld [vmem:[#allocation6 + $0x360] sm:$0xff]
    %v245 = vld [vmem:[#allocation6 + $0x368] sm:$0xff]
    %v246 = vld [vmem:[#allocation6 + $0x370] sm:$0xff]
    %v247 = vld [vmem:[#allocation6 + $0x378] sm:$0xff]
    %v248 = vld [vmem:[#allocation6 + $0x380] sm:$0xff]
    %v249 = vld [vmem:[#allocation6 + $0x388] sm:$0xff]
    %v250 = vld [vmem:[#allocation6 + $0x390] sm:$0xff]
    %v251 = vld [vmem:[#allocation6 + $0x398] sm:$0xff]
    %v252 = vld [vmem:[#allocation6 + $0x3a0] sm:$0xff]
    %v253 = vld [vmem:[#allocation6 + $0x3a8] sm:$0xff]
    %v254 = vld [vmem:[#allocation6 + $0x3b0] sm:$0xff]
    %v255 = vld [vmem:[#allocation6 + $0x3b8] sm:$0xff]
    %v256 = vld [vmem:[#allocation6 + $0x3c0] sm:$0xff]
    %v257 = vld [vmem:[#allocation6 + $0x3c8] sm:$0xff]
    %v258 = vld [vmem:[#allocation6 + $0x3d0] sm:$0xff]
    %v259 = vld [vmem:[#allocation6 + $0x3d8] sm:$0xff]
    %v260 = vld [vmem:[#allocation6 + $0x3e0] sm:$0xff]
    %v261 = vld [vmem:[#allocation6 + $0x3e8] sm:$0xff]
    %v262 = vld [vmem:[#allocation6 + $0x3f0] sm:$0xff]
    %v263 = vld [vmem:[#allocation6 + $0x3f8] sm:$0xff]
    %v264 = vld [vmem:[#allocation6 + $0x400] sm:$0xff]
    %v265 = vld [vmem:[#allocation6 + $0x408] sm:$0xff]
    %v266 = vld [vmem:[#allocation6 + $0x410] sm:$0xff]
    %v267 = vld [vmem:[#allocation6 + $0x418] sm:$0xff]
    %v268 = vld [vmem:[#allocation6 + $0x420] sm:$0xff]
    %v269 = vld [vmem:[#allocation6 + $0x428] sm:$0xff]
    %v270 = vld [vmem:[#allocation6 + $0x430] sm:$0xff]
    %v271 = vld [vmem:[#allocation6 + $0x438] sm:$0xff]
    %v272 = vld [vmem:[#allocation6 + $0x440] sm:$0xff]
    %v273 = vld [vmem:[#allocation6 + $0x448] sm:$0xff]
    %v274 = vld [vmem:[#allocation6 + $0x450] sm:$0xff]
    %v275 = vld [vmem:[#allocation6 + $0x458] sm:$0xff]
    %v276 = vld [vmem:[#allocation6 + $0x460] sm:$0xff]
    %v277 = vld [vmem:[#allocation6 + $0x468] sm:$0xff]
    %v278 = vld [vmem:[#allocation6 + $0x470] sm:$0xff]
    %v279 = vld [vmem:[#allocation6 + $0x478] sm:$0xff]
    %v280 = vld [vmem:[#allocation6 + $0x480] sm:$0xff]
    %v281 = vld [vmem:[#allocation6 + $0x488] sm:$0xff]
    %v282 = vld [vmem:[#allocation6 + $0x490] sm:$0xff]
    %v283 = vld [vmem:[#allocation6 + $0x498] sm:$0xff]
    %v284 = vld [vmem:[#allocation6 + $0x4a0] sm:$0xff]
    %v285 = vld [vmem:[#allocation6 + $0x4a8] sm:$0xff]
    %v286 = vld [vmem:[#allocation6 + $0x4b0] sm:$0xff]
    %v287 = vld [vmem:[#allocation6 + $0x4b8] sm:$0xff]
    %v288 = vld [vmem:[#allocation6 + $0x4c0] sm:$0xff]
    %v289 = vld [vmem:[#allocation6 + $0x4c8] sm:$0xff]
    %v290 = vld [vmem:[#allocation6 + $0x4d0] sm:$0xff]
    %v291 = vld [vmem:[#allocation6 + $0x4d8] sm:$0xff]
    %v292 = vld [vmem:[#allocation6 + $0x4e0] sm:$0xff]
    %v293 = vld [vmem:[#allocation6 + $0x4e8] sm:$0xff]
    %v294 = vld [vmem:[#allocation6 + $0x4f0] sm:$0xff]
    %v295 = vld [vmem:[#allocation6 + $0x4f8] sm:$0xff]
    %v296 = vld [vmem:[#allocation6 + $0x500] sm:$0xff]
    %v297 = vld [vmem:[#allocation6 + $0x508] sm:$0xff]
    %v298 = vld [vmem:[#allocation6 + $0x510] sm:$0xff]
    %v299 = vld [vmem:[#allocation6 + $0x518] sm:$0xff]
    %v300 = vld [vmem:[#allocation6 + $0x520] sm:$0xff]
    %v301 = vld [vmem:[#allocation6 + $0x528] sm:$0xff]
    %v302 = vld [vmem:[#allocation6 + $0x530] sm:$0xff]
    %v303 = vld [vmem:[#allocation6 + $0x538] sm:$0xff]
    %v304 = vld [vmem:[#allocation6 + $0x540] sm:$0xff]
    %v305 = vld [vmem:[#allocation6 + $0x548] sm:$0xff]
    %v306 = vld [vmem:[#allocation6 + $0x550] sm:$0xff]
    %v307 = vld [vmem:[#allocation6 + $0x558] sm:$0xff]
    %v308 = vld [vmem:[#allocation6 + $0x560] sm:$0xff]
    %v309 = vld [vmem:[#allocation6 + $0x568] sm:$0xff]
    %v310 = vld [vmem:[#allocation6 + $0x570] sm:$0xff]
    %v311 = vld [vmem:[#allocation6 + $0x578] sm:$0xff]
    %v312 = vld [vmem:[#allocation6 + $0x580] sm:$0xff]
    %v313 = vld [vmem:[#allocation6 + $0x588] sm:$0xff]
    %v314 = vld [vmem:[#allocation6 + $0x590] sm:$0xff]
    %v315 = vld [vmem:[#allocation6 + $0x598] sm:$0xff]
    %v316 = vld [vmem:[#allocation6 + $0x5a0] sm:$0xff]
    %v317 = vld [vmem:[#allocation6 + $0x5a8] sm:$0xff]
    %v318 = vld [vmem:[#allocation6 + $0x5b0] sm:$0xff]
    %v319 = vld [vmem:[#allocation6 + $0x5b8] sm:$0xff]
    %v320 = vld [vmem:[#allocation6 + $0x5c0] sm:$0xff]
    %v321 = vld [vmem:[#allocation6 + $0x5c8] sm:$0xff]
    %v322 = vld [vmem:[#allocation6 + $0x5d0] sm:$0xff]
    %v323 = vld [vmem:[#allocation6 + $0x5d8] sm:$0xff]
    %v324 = vld [vmem:[#allocation6 + $0x5e0] sm:$0xff]
    %v325 = vld [vmem:[#allocation6 + $0x5e8] sm:$0xff]
    %v326 = vld [vmem:[#allocation6 + $0x5f0] sm:$0xff]
    %v327 = vld [vmem:[#allocation6 + $0x5f8] sm:$0xff]
    %v328 = vld [vmem:[#allocation6 + $0x600] sm:$0xff]
    %v329 = vld [vmem:[#allocation6 + $0x608] sm:$0xff]
    %v330 = vld [vmem:[#allocation6 + $0x610] sm:$0xff]
    %v331 = vld [vmem:[#allocation6 + $0x618] sm:$0xff]
    %v332 = vld [vmem:[#allocation6 + $0x620] sm:$0xff]
    %v333 = vld [vmem:[#allocation6 + $0x628] sm:$0xff]
    %v334 = vld [vmem:[#allocation6 + $0x630] sm:$0xff]
    %v335 = vld [vmem:[#allocation6 + $0x638] sm:$0xff]
    %v336 = vld [vmem:[#allocation6 + $0x640] sm:$0xff]
    %v337 = vld [vmem:[#allocation6 + $0x648] sm:$0xff]
    %v338 = vld [vmem:[#allocation6 + $0x650] sm:$0xff]
    %v339 = vld [vmem:[#allocation6 + $0x658] sm:$0xff]
    %v340 = vld [vmem:[#allocation6 + $0x660] sm:$0xff]
    %v341 = vld [vmem:[#allocation6 + $0x668] sm:$0xff]
    %v342 = vld [vmem:[#allocation6 + $0x670] sm:$0xff]
    %v343 = vld [vmem:[#allocation6 + $0x678] sm:$0xff]
    %v344 = vld [vmem:[#allocation6 + $0x680] sm:$0xff]
    %v345 = vld [vmem:[#allocation6 + $0x688] sm:$0xff]
    %v346 = vld [vmem:[#allocation6 + $0x690] sm:$0xff]
    %v347 = vld [vmem:[#allocation6 + $0x698] sm:$0xff]
    %v348 = vld [vmem:[#allocation6 + $0x6a0] sm:$0xff]
    %v349 = vld [vmem:[#allocation6 + $0x6a8] sm:$0xff]
    %v350 = vld [vmem:[#allocation6 + $0x6b0] sm:$0xff]
    %v351 = vld [vmem:[#allocation6 + $0x6b8] sm:$0xff]
    %v352 = vld [vmem:[#allocation6 + $0x6c0] sm:$0xff]
    %v353 = vld [vmem:[#allocation6 + $0x6c8] sm:$0xff]
    %v354 = vld [vmem:[#allocation6 + $0x6d0] sm:$0xff]
    %v355 = vld [vmem:[#allocation6 + $0x6d8] sm:$0xff]
    %v356 = vld [vmem:[#allocation6 + $0x6e0] sm:$0xff]
    %v357 = vld [vmem:[#allocation6 + $0x6e8] sm:$0xff]
    %v358 = vld [vmem:[#allocation6 + $0x6f0] sm:$0xff]
    %v359 = vld [vmem:[#allocation6 + $0x6f8] sm:$0xff]
    %v360 = vld [vmem:[#allocation6 + $0x700] sm:$0xff]
    %v361 = vld [vmem:[#allocation6 + $0x708] sm:$0xff]
    %v362 = vld [vmem:[#allocation6 + $0x710] sm:$0xff]
    %v363 = vld [vmem:[#allocation6 + $0x718] sm:$0xff]
    %v364 = vld [vmem:[#allocation6 + $0x720] sm:$0xff]
    %v365 = vld [vmem:[#allocation6 + $0x728] sm:$0xff]
    %v366 = vld [vmem:[#allocation6 + $0x730] sm:$0xff]
    %v367 = vld [vmem:[#allocation6 + $0x738] sm:$0xff]
    %v368 = vld [vmem:[#allocation6 + $0x740] sm:$0xff]
    %v369 = vld [vmem:[#allocation6 + $0x748] sm:$0xff]
    %v370 = vld [vmem:[#allocation6 + $0x750] sm:$0xff]
    %v371 = vld [vmem:[#allocation6 + $0x758] sm:$0xff]
    %v372 = vld [vmem:[#allocation6 + $0x760] sm:$0xff]
    %v373 = vld [vmem:[#allocation6 + $0x768] sm:$0xff]
    %v374 = vld [vmem:[#allocation6 + $0x770] sm:$0xff]
    %v375 = vld [vmem:[#allocation6 + $0x778] sm:$0xff]
    %v376 = vld [vmem:[#allocation6 + $0x780] sm:$0xff]
    %v377 = vld [vmem:[#allocation6 + $0x788] sm:$0xff]
    %v378 = vld [vmem:[#allocation6 + $0x790] sm:$0xff]
    %v379 = vld [vmem:[#allocation6 + $0x798] sm:$0xff]
    %v380 = vld [vmem:[#allocation6 + $0x7a0] sm:$0xff]
    %v381 = vld [vmem:[#allocation6 + $0x7a8] sm:$0xff]
    %v382 = vld [vmem:[#allocation6 + $0x7b0] sm:$0xff]
    %v383 = vld [vmem:[#allocation6 + $0x7b8] sm:$0xff]
    %v384 = vld [vmem:[#allocation6 + $0x7c0] sm:$0xff]
    %v385 = vld [vmem:[#allocation6 + $0x7c8] sm:$0xff]
    %v386 = vld [vmem:[#allocation6 + $0x7d0] sm:$0xff]
    %v387 = vld [vmem:[#allocation6 + $0x7d8] sm:$0xff]
    %v388 = vld [vmem:[#allocation6 + $0x7e0] sm:$0xff]
    %v389 = vld [vmem:[#allocation6 + $0x7e8] sm:$0xff]
    %v390 = vld [vmem:[#allocation6 + $0x7f0] sm:$0xff]
    %v391 = vld [vmem:[#allocation6 + $0x7f8] sm:$0xff]
    %v392 = vld [vmem:[#allocation6 + $0x800] sm:$0xff]
    %v393 = vld [vmem:[#allocation6 + $0x808] sm:$0xff]
    %v394 = vld [vmem:[#allocation6 + $0x810] sm:$0xff]
    %v395 = vld [vmem:[#allocation6 + $0x818] sm:$0xff]
    %v396 = vld [vmem:[#allocation6 + $0x820] sm:$0xff]
    %v397 = vld [vmem:[#allocation6 + $0x828] sm:$0xff]
    %v398 = vld [vmem:[#allocation6 + $0x830] sm:$0xff]
    %v399 = vld [vmem:[#allocation6 + $0x838] sm:$0xff]
    %v400 = vld [vmem:[#allocation6 + $0x840] sm:$0xff]
    %v401 = vld [vmem:[#allocation6 + $0x848] sm:$0xff]
    %v402 = vld [vmem:[#allocation6 + $0x850] sm:$0xff]
    %v403 = vld [vmem:[#allocation6 + $0x858] sm:$0xff]
    %v404 = vld [vmem:[#allocation6 + $0x860] sm:$0xff]
    %v405 = vld [vmem:[#allocation6 + $0x868] sm:$0xff]
    %v406 = vld [vmem:[#allocation6 + $0x870] sm:$0xff]
    %v407 = vld [vmem:[#allocation6 + $0x878] sm:$0xff]
    %v408 = vld [vmem:[#allocation6 + $0x880] sm:$0xff]
    %v409 = vld [vmem:[#allocation6 + $0x888] sm:$0xff]
    %v410 = vld [vmem:[#allocation6 + $0x890] sm:$0xff]
    %v411 = vld [vmem:[#allocation6 + $0x898] sm:$0xff]
    %v412 = vld [vmem:[#allocation6 + $0x8a0] sm:$0xff]
    %v413 = vld [vmem:[#allocation6 + $0x8a8] sm:$0xff]
    %v414 = vld [vmem:[#allocation6 + $0x8b0] sm:$0xff]
    %v415 = vld [vmem:[#allocation6 + $0x8b8] sm:$0xff]
    %v416 = vld [vmem:[#allocation6 + $0x8c0] sm:$0xff]
    %v417 = vld [vmem:[#allocation6 + $0x8c8] sm:$0xff]
    %v418 = vld [vmem:[#allocation6 + $0x8d0] sm:$0xff]
    %v419 = vld [vmem:[#allocation6 + $0x8d8] sm:$0xff]
    %v420 = vld [vmem:[#allocation6 + $0x8e0] sm:$0xff]
    %v421 = vld [vmem:[#allocation6 + $0x8e8] sm:$0xff]
    %v422 = vld [vmem:[#allocation6 + $0x8f0] sm:$0xff]
    %v423 = vld [vmem:[#allocation6 + $0x8f8] sm:$0xff]
    %v424 = vld [vmem:[#allocation6 + $0x900] sm:$0xff]
    %v425 = vld [vmem:[#allocation6 + $0x908] sm:$0xff]
    %v426 = vld [vmem:[#allocation6 + $0x910] sm:$0xff]
    %v427 = vld [vmem:[#allocation6 + $0x918] sm:$0xff]
    %v428 = vld [vmem:[#allocation6 + $0x920] sm:$0xff]
    %v429 = vld [vmem:[#allocation6 + $0x928] sm:$0xff]
    %v430 = vld [vmem:[#allocation6 + $0x930] sm:$0xff]
    %v431 = vld [vmem:[#allocation6 + $0x938] sm:$0xff]
    %v432 = vld [vmem:[#allocation6 + $0x940] sm:$0xff]
    %v433 = vld [vmem:[#allocation6 + $0x948] sm:$0xff]
    %v434 = vld [vmem:[#allocation6 + $0x950] sm:$0xff]
    %v435 = vld [vmem:[#allocation6 + $0x958] sm:$0xff]
    %v436 = vld [vmem:[#allocation6 + $0x960] sm:$0xff]
    %v437 = vld [vmem:[#allocation6 + $0x968] sm:$0xff]
    %v438 = vld [vmem:[#allocation6 + $0x970] sm:$0xff]
    %v439 = vld [vmem:[#allocation6 + $0x978] sm:$0xff]
    %v440 = vld [vmem:[#allocation6 + $0x980] sm:$0xff]
    %v441 = vld [vmem:[#allocation6 + $0x988] sm:$0xff]
    %v442 = vld [vmem:[#allocation6 + $0x990] sm:$0xff]
    %v443 = vld [vmem:[#allocation6 + $0x998] sm:$0xff]
    %v444 = vld [vmem:[#allocation6 + $0x9a0] sm:$0xff]
    %v445 = vld [vmem:[#allocation6 + $0x9a8] sm:$0xff]
    %v446 = vld [vmem:[#allocation6 + $0x9b0] sm:$0xff]
    %v447 = vld [vmem:[#allocation6 + $0x9b8] sm:$0xff]
    %v448 = vld [vmem:[#allocation6 + $0x9c0] sm:$0xff]
    %v449 = vld [vmem:[#allocation6 + $0x9c8] sm:$0xff]
    %v450 = vld [vmem:[#allocation6 + $0x9d0] sm:$0xff]
    %v451 = vld [vmem:[#allocation6 + $0x9d8] sm:$0xff]
    %v452 = vld [vmem:[#allocation6 + $0x9e0] sm:$0xff]
    %v453 = vld [vmem:[#allocation6 + $0x9e8] sm:$0xff]
    %v454 = vld [vmem:[#allocation6 + $0x9f0] sm:$0xff]
    %v455 = vld [vmem:[#allocation6 + $0x9f8] sm:$0xff]
    %v456 = vld [vmem:[#allocation6 + $0xa00] sm:$0xff]
    %v457 = vld [vmem:[#allocation6 + $0xa08] sm:$0xff]
    %v458 = vld [vmem:[#allocation6 + $0xa10] sm:$0xff]
    %v459 = vld [vmem:[#allocation6 + $0xa18] sm:$0xff]
    %v460 = vld [vmem:[#allocation6 + $0xa20] sm:$0xff]
    %v461 = vld [vmem:[#allocation6 + $0xa28] sm:$0xff]
    %v462 = vld [vmem:[#allocation6 + $0xa30] sm:$0xff]
    %v463 = vld [vmem:[#allocation6 + $0xa38] sm:$0xff]
    %v464 = vld [vmem:[#allocation6 + $0xa40] sm:$0xff]
    %v465 = vld [vmem:[#allocation6 + $0xa48] sm:$0xff]
    %v466 = vld [vmem:[#allocation6 + $0xa50] sm:$0xff]
    %v467 = vld [vmem:[#allocation6 + $0xa58] sm:$0xff]
    %v468 = vld [vmem:[#allocation6 + $0xa60] sm:$0xff]
    %v469 = vld [vmem:[#allocation6 + $0xa68] sm:$0xff]
    %v470 = vld [vmem:[#allocation6 + $0xa70] sm:$0xff]
    %v471 = vld [vmem:[#allocation6 + $0xa78] sm:$0xff]
    %v472 = vld [vmem:[#allocation6 + $0xa80] sm:$0xff]
    %v473 = vld [vmem:[#allocation6 + $0xa88] sm:$0xff]
    %v474 = vld [vmem:[#allocation6 + $0xa90] sm:$0xff]
    %v475 = vld [vmem:[#allocation6 + $0xa98] sm:$0xff]
    %v476 = vld [vmem:[#allocation6 + $0xaa0] sm:$0xff]
    %v477 = vld [vmem:[#allocation6 + $0xaa8] sm:$0xff]
    %v478 = vld [vmem:[#allocation6 + $0xab0] sm:$0xff]
    %v479 = vld [vmem:[#allocation6 + $0xab8] sm:$0xff]
    %v480 = vld [vmem:[#allocation6 + $0xac0] sm:$0xff]
    %v481 = vld [vmem:[#allocation6 + $0xac8] sm:$0xff]
    %v482 = vld [vmem:[#allocation6 + $0xad0] sm:$0xff]
    %v483 = vld [vmem:[#allocation6 + $0xad8] sm:$0xff]
    %v484 = vld [vmem:[#allocation6 + $0xae0] sm:$0xff]
    %v485 = vld [vmem:[#allocation6 + $0xae8] sm:$0xff]
    %v486 = vld [vmem:[#allocation6 + $0xaf0] sm:$0xff]
    %v487 = vld [vmem:[#allocation6 + $0xaf8] sm:$0xff]
    %v488 = vld [vmem:[#allocation6 + $0xb00] sm:$0xff]
    %v489 = vld [vmem:[#allocation6 + $0xb08] sm:$0xff]
    %v490 = vld [vmem:[#allocation6 + $0xb10] sm:$0xff]
    %v491 = vld [vmem:[#allocation6 + $0xb18] sm:$0xff]
    %v492 = vld [vmem:[#allocation6 + $0xb20] sm:$0xff]
    %v493 = vld [vmem:[#allocation6 + $0xb28] sm:$0xff]
    %v494 = vld [vmem:[#allocation6 + $0xb30] sm:$0xff]
    %v495 = vld [vmem:[#allocation6 + $0xb38] sm:$0xff]
    %v496 = vld [vmem:[#allocation6 + $0xb40] sm:$0xff]
    %v497 = vld [vmem:[#allocation6 + $0xb48] sm:$0xff]
    %v498 = vld [vmem:[#allocation6 + $0xb50] sm:$0xff]
    %v499 = vld [vmem:[#allocation6 + $0xb58] sm:$0xff]
    %v500 = vld [vmem:[#allocation6 + $0xb60] sm:$0xff]
    %v501 = vld [vmem:[#allocation6 + $0xb68] sm:$0xff]
    %v502 = vld [vmem:[#allocation6 + $0xb70] sm:$0xff]
    %v503 = vld [vmem:[#allocation6 + $0xb78] sm:$0xff]
    %v504 = vld [vmem:[#allocation6 + $0xb80] sm:$0xff]
    %v505 = vld [vmem:[#allocation6 + $0xb88] sm:$0xff]
    %v506 = vld [vmem:[#allocation6 + $0xb90] sm:$0xff]
    %v507 = vld [vmem:[#allocation6 + $0xb98] sm:$0xff]
    %v508 = vld [vmem:[#allocation6 + $0xba0] sm:$0xff]
    %v509 = vld [vmem:[#allocation6 + $0xba8] sm:$0xff]
    %v510 = vld [vmem:[#allocation6 + $0xbb0] sm:$0xff]
    %v511 = vld [vmem:[#allocation6 + $0xbb8] sm:$0xff]
    %v512 = vld [vmem:[#allocation6 + $0xbc0] sm:$0xff]
    %v513 = vld [vmem:[#allocation6 + $0xbc8] sm:$0xff]
    %v514 = vld [vmem:[#allocation6 + $0xbd0] sm:$0xff]
    %v515 = vld [vmem:[#allocation6 + $0xbd8] sm:$0xff]
    %v516 = vld [vmem:[#allocation6 + $0xbe0] sm:$0xff]
    %v517 = vld [vmem:[#allocation6 + $0xbe8] sm:$0xff]
    %v518 = vld [vmem:[#allocation6 + $0xbf0] sm:$0xff]
    %v519 = vld [vmem:[#allocation6 + $0xbf8] sm:$0xff]
    %v520 = vld [vmem:[#allocation8] sm:$0xff]
    %v522 = vlaneseq
    %v523 = vshrl.u32 %v522, 7
    %v524 = vsub.s32 0, %v523
    %v525 = vrot.slane %v520, %v524
    %v526 = vlaneseq
    %v527 = vshrl.u32 %v526, 7
    %v528 = vsub.s32 1, %v527
    %v529 = vrot.slane %v520, %v528
    %v530 = vlaneseq
    %v531 = vshrl.u32 %v530, 7
    %v532 = vsub.s32 2, %v531
    %v533 = vrot.slane %v520, %v532
    %v534 = vlaneseq
    %v535 = vshrl.u32 %v534, 7
    %v536 = vsub.s32 3, %v535
    %v537 = vrot.slane %v520, %v536
    %v538 = vlaneseq
    %v539 = vshrl.u32 %v538, 7
    %v540 = vsub.s32 4, %v539
    %v541 = vrot.slane %v520, %v540
    %v542 = vlaneseq
    %v543 = vshrl.u32 %v542, 7
    %v544 = vsub.s32 5, %v543
    %v545 = vrot.slane %v520, %v544
    %v546 = vlaneseq
    %v547 = vshrl.u32 %v546, 7
    %v548 = vsub.s32 6, %v547
    %v549 = vrot.slane %v520, %v548
    %v550 = vlaneseq
    %v551 = vshrl.u32 %v550, 7
    %v552 = vsub.s32 7, %v551
    %v553 = vrot.slane %v520, %v552
    %562 = vmatprep.subr.mxu0 %v137
    %563 = vmatpush1.msra.mxu0 %v136
    %564 = vmatprep.subr.mxu0 %v145
    %565 = vmatpush1.msra.mxu0 %v144
    %566 = vmatprep.subr.mxu0 %v153
    %567 = vmatpush1.msra.mxu0 %v152
    %568 = vmatprep.subr.mxu0 %v161
    %569 = vmatpush1.msra.mxu0 %v160
    %570 = vmatprep.subr.mxu0 %v169
    %571 = vmatpush1.msra.mxu0 %v168
    %572 = vmatprep.subr.mxu0 %v177
    %573 = vmatpush1.msra.mxu0 %v176
    %574 = vmatprep.subr.mxu0 %v185
    %575 = vmatpush1.msra.mxu0 %v184
    %576 = vmatprep.subr.mxu0 %v193
    %577 = vmatpush1.msra.mxu0 %v192
    %578 = vmatprep.subr.mxu0 %v201
    %579 = vmatpush1.msra.mxu0 %v200
    %580 = vmatprep.subr.mxu0 %v209
    %581 = vmatpush1.msra.mxu0 %v208
    %582 = vmatprep.subr.mxu0 %v217
    %583 = vmatpush1.msra.mxu0 %v216
    %584 = vmatprep.subr.mxu0 %v225
    %585 = vmatpush1.msra.mxu0 %v224
    %586 = vmatprep.subr.mxu0 %v233
    %587 = vmatpush1.msra.mxu0 %v232
    %588 = vmatprep.subr.mxu0 %v241
    %589 = vmatpush1.msra.mxu0 %v240
    %590 = vmatprep.subr.mxu0 %v249
    %591 = vmatpush1.msra.mxu0 %v248
    %592 = vmatprep.subr.mxu0 %v257
    %593 = vmatpush1.msra.mxu0 %v256
    %594 = vmatprep.subr.mxu0 %v265
    %595 = vmatpush1.msra.mxu0 %v264
    %596 = vmatprep.subr.mxu0 %v273
    %597 = vmatpush1.msra.mxu0 %v272
    %598 = vmatprep.subr.mxu0 %v281
    %599 = vmatpush1.msra.mxu0 %v280
    %600 = vmatprep.subr.mxu0 %v289
    %601 = vmatpush1.msra.mxu0 %v288
    %602 = vmatprep.subr.mxu0 %v297
    %603 = vmatpush1.msra.mxu0 %v296
    %604 = vmatprep.subr.mxu0 %v305
    %605 = vmatpush1.msra.mxu0 %v304
    %606 = vmatprep.subr.mxu0 %v313
    %607 = vmatpush1.msra.mxu0 %v312
    %608 = vmatprep.subr.mxu0 %v321
    %609 = vmatpush1.msra.mxu0 %v320
    %610 = vmatprep.subr.mxu0 %v329
    %611 = vmatpush1.msra.mxu0 %v328
    %612 = vmatprep.subr.mxu0 %v337
    %613 = vmatpush1.msra.mxu0 %v336
    %614 = vmatprep.subr.mxu0 %v345
    %615 = vmatpush1.msra.mxu0 %v344
    %616 = vmatprep.subr.mxu0 %v353
    %617 = vmatpush1.msra.mxu0 %v352
    %618 = vmatprep.subr.mxu0 %v361
    %619 = vmatpush1.msra.mxu0 %v360
    %620 = vmatprep.subr.mxu0 %v369
    %621 = vmatpush1.msra.mxu0 %v368
    %622 = vmatprep.subr.mxu0 %v377
    %623 = vmatpush1.msra.mxu0 %v376
    %624 = vmatprep.subr.mxu0 %v385
    %625 = vmatpush1.msra.mxu0 %v384
    %626 = vmatprep.mubr.f32.mxu0 %v125
    %627 = vmatmul.mubr.f32.gmra.mrb[0].mxu0 %v124
    %v628 = vpop.f32.mrb[0].mxu0
    %v629 = vadd.f32 %v525, %v628
    %v630 = vpop.f32.mrb[0].mxu0
    %v631 = vadd.f32 %v529, %v630
    %632 = vmatprep.mubr.f32.mxu0 %v128
    %633 = vmatmul.mubr.f32.gmra.mrb[0].mxu0 %v127
    %v634 = vpop.f32.mrb[0].mxu0
    %v635 = vadd.f32 %v525, %v634
    %v636 = vpop.f32.mrb[0].mxu0
    %v637 = vadd.f32 %v529, %v636
    %638 = vmatprep.mubr.f32.mxu0 %v131
    %639 = vmatmul.mubr.f32.gmra.mrb[0].mxu0 %v130
    %v640 = vpop.f32.mrb[0].mxu0
    %v641 = vadd.f32 %v525, %v640
    %v642 = vpop.f32.mrb[0].mxu0
    %v643 = vadd.f32 %v529, %v642
    %644 = vmatprep.mubr.f32.mxu0 %v134
    %645 = vmatmul.mubr.f32.gmra.mrb[0].mxu0 %v133
    %v646 = vpop.f32.mrb[0].mxu0
    %v647 = vadd.f32 %v525, %v646
    %v648 = vpop.f32.mrb[0].mxu0
    %v649 = vadd.f32 %v529, %v648
    %650 = vdwg.mxu0
    %651 = vmatprep.subr.mxu0 %v393
    %652 = vmatpush1.msra.mxu0 %v392
    %653 = vmatprep.subr.mxu0 %v401
    %654 = vmatpush1.msra.mxu0 %v400
    %655 = vmatprep.subr.mxu0 %v409
    %656 = vmatpush1.msra.mxu0 %v408
    %657 = vmatprep.subr.mxu0 %v417
    %658 = vmatpush1.msra.mxu0 %v416
    %659 = vmatprep.subr.mxu0 %v425
    %660 = vmatpush1.msra.mxu0 %v424
    %661 = vmatprep.subr.mxu0 %v433
    %662 = vmatpush1.msra.mxu0 %v432
    %663 = vmatprep.subr.mxu0 %v441
    %664 = vmatpush1.msra.mxu0 %v440
    %665 = vmatprep.subr.mxu0 %v449
    %666 = vmatpush1.msra.mxu0 %v448
    %667 = vmatprep.subr.mxu0 %v457
    %668 = vmatpush1.msra.mxu0 %v456
    %669 = vmatprep.subr.mxu0 %v465
    %670 = vmatpush1.msra.mxu0 %v464
    %671 = vmatprep.subr.mxu0 %v473
    %672 = vmatpush1.msra.mxu0 %v472
    %673 = vmatprep.subr.mxu0 %v481
    %674 = vmatpush1.msra.mxu0 %v480
    %675 = vmatprep.subr.mxu0 %v489
    %676 = vmatpush1.msra.mxu0 %v488
    %677 = vmatprep.subr.mxu0 %v497
    %678 = vmatpush1.msra.mxu0 %v496
    %679 = vmatprep.subr.mxu0 %v505
    %680 = vmatpush1.msra.mxu0 %v504
    %681 = vmatprep.subr.mxu0 %v513
    %682 = vmatpush1.msra.mxu0 %v512
    %683 = vmatprep.subr.mxu0 0.0
    %684 = vmatpush1.msra.mxu0 0.0
    %685 = vmatprep.subr.mxu0 0.0
    %686 = vmatpush1.msra.mxu0 0.0
    %687 = vmatprep.subr.mxu0 0.0
    %688 = vmatpush1.msra.mxu0 0.0
    %689 = vmatprep.subr.mxu0 0.0
    %690 = vmatpush1.msra.mxu0 0.0
    %691 = vmatprep.subr.mxu0 0.0
    %692 = vmatpush1.msra.mxu0 0.0
    %693 = vmatprep.subr.mxu0 0.0
    %694 = vmatpush1.msra.mxu0 0.0
    %695 = vmatprep.subr.mxu0 0.0
    %696 = vmatpush1.msra.mxu0 0.0
    %697 = vmatprep.subr.mxu0 0.0
    %698 = vmatpush1.msra.mxu0 0.0
    %699 = vmatprep.subr.mxu0 0.0
    %700 = vmatpush1.msra.mxu0 0.0
    %701 = vmatprep.subr.mxu0 0.0
    %702 = vmatpush1.msra.mxu0 0.0
    %703 = vmatprep.subr.mxu0 0.0
    %704 = vmatpush1.msra.mxu0 0.0
    %705 = vmatprep.subr.mxu0 0.0
    %706 = vmatpush1.msra.mxu0 0.0
    %707 = vmatprep.subr.mxu0 0.0
    %708 = vmatpush1.msra.mxu0 0.0
    %709 = vmatprep.subr.mxu0 0.0
    %710 = vmatpush1.msra.mxu0 0.0
    %711 = vmatprep.subr.mxu0 0.0
    %712 = vmatpush1.msra.mxu0 0.0
    %713 = vmatprep.subr.mxu0 0.0
    %714 = vmatpush1.msra.mxu0 0.0
    %715 = vmatprep.mubr.f32.mxu0 0.0
    %716 = vmatmul.mubr.f32.gmra.mrb[0].mxu0 %v126
    %v717 = vpop.f32.mrb[0].mxu0
    %v718 = vadd.f32 %v629, %v717
    %v719 = vpop.f32.mrb[0].mxu0
    %v720 = vadd.f32 %v631, %v719
    %721 = vmatprep.mubr.f32.mxu0 0.0
    %722 = vmatmul.mubr.f32.gmra.mrb[0].mxu0 %v129
    %v723 = vpop.f32.mrb[0].mxu0
    %v724 = vadd.f32 %v635, %v723
    %v725 = vpop.f32.mrb[0].mxu0
    %v726 = vadd.f32 %v637, %v725
    %727 = vmatprep.mubr.f32.mxu0 0.0
    %728 = vmatmul.mubr.f32.gmra.mrb[0].mxu0 %v132
    %v729 = vpop.f32.mrb[0].mxu0
    %v730 = vadd.f32 %v641, %v729
    %v731 = vpop.f32.mrb[0].mxu0
    %v732 = vadd.f32 %v643, %v731
    %733 = vmatprep.mubr.f32.mxu0 0.0
    %734 = vmatmul.mubr.f32.gmra.mrb[0].mxu0 %v135
    %v735 = vpop.f32.mrb[0].mxu0
    %v736 = vadd.f32 %v647, %v735
    %v737 = vpop.f32.mrb[0].mxu0
    %v738 = vadd.f32 %v649, %v737
    %739 = vdwg.mxu0
    %740 = vmatprep.subr.mxu0 %v139
    %741 = vmatpush1.msra.mxu0 %v138
    %742 = vmatprep.subr.mxu0 %v147
    %743 = vmatpush1.msra.mxu0 %v146
    %744 = vmatprep.subr.mxu0 %v155
    %745 = vmatpush1.msra.mxu0 %v154
    %746 = vmatprep.subr.mxu0 %v163
    %747 = vmatpush1.msra.mxu0 %v162
    %748 = vmatprep.subr.mxu0 %v171
    %749 = vmatpush1.msra.mxu0 %v170
    %750 = vmatprep.subr.mxu0 %v179
    %751 = vmatpush1.msra.mxu0 %v178
    %752 = vmatprep.subr.mxu0 %v187
    %753 = vmatpush1.msra.mxu0 %v186
    %754 = vmatprep.subr.mxu0 %v195
    %755 = vmatpush1.msra.mxu0 %v194
    %756 = vmatprep.subr.mxu0 %v203
    %757 = vmatpush1.msra.mxu0 %v202
    %758 = vmatprep.subr.mxu0 %v211
    %759 = vmatpush1.msra.mxu0 %v210
    %760 = vmatprep.subr.mxu0 %v219
    %761 = vmatpush1.msra.mxu0 %v218
    %762 = vmatprep.subr.mxu0 %v227
    %763 = vmatpush1.msra.mxu0 %v226
    %764 = vmatprep.subr.mxu0 %v235
    %765 = vmatpush1.msra.mxu0 %v234
    %766 = vmatprep.subr.mxu0 %v243
    %767 = vmatpush1.msra.mxu0 %v242
    %768 = vmatprep.subr.mxu0 %v251
    %769 = vmatpush1.msra.mxu0 %v250
    %770 = vmatprep.subr.mxu0 %v259
    %771 = vmatpush1.msra.mxu0 %v258
    %772 = vmatprep.subr.mxu0 %v267
    %773 = vmatpush1.msra.mxu0 %v266
    %774 = vmatprep.subr.mxu0 %v275
    %775 = vmatpush1.msra.mxu0 %v274
    %776 = vmatprep.subr.mxu0 %v283
    %777 = vmatpush1.msra.mxu0 %v282
    %778 = vmatprep.subr.mxu0 %v291
    %779 = vmatpush1.msra.mxu0 %v290
    %780 = vmatprep.subr.mxu0 %v299
    %781 = vmatpush1.msra.mxu0 %v298
    %782 = vmatprep.subr.mxu0 %v307
    %783 = vmatpush1.msra.mxu0 %v306
    %784 = vmatprep.subr.mxu0 %v315
    %785 = vmatpush1.msra.mxu0 %v314
    %786 = vmatprep.subr.mxu0 %v323
    %787 = vmatpush1.msra.mxu0 %v322
    %788 = vmatprep.subr.mxu0 %v331
    %789 = vmatpush1.msra.mxu0 %v330
    %790 = vmatprep.subr.mxu0 %v339
    %791 = vmatpush1.msra.mxu0 %v338
    %792 = vmatprep.subr.mxu0 %v347
    %793 = vmatpush1.msra.mxu0 %v346
    %794 = vmatprep.subr.mxu0 %v355
    %795 = vmatpush1.msra.mxu0 %v354
    %796 = vmatprep.subr.mxu0 %v363
    %797 = vmatpush1.msra.mxu0 %v362
    %798 = vmatprep.subr.mxu0 %v371
    %799 = vmatpush1.msra.mxu0 %v370
    %800 = vmatprep.subr.mxu0 %v379
    %801 = vmatpush1.msra.mxu0 %v378
    %802 = vmatprep.subr.mxu0 %v387
    %803 = vmatpush1.msra.mxu0 %v386
    %804 = vmatprep.mubr.f32.mxu0 %v125
    %805 = vmatmul.mubr.f32.gmra.mrb[0].mxu0 %v124
    %v806 = vpop.f32.mrb[0].mxu0
    %v807 = vadd.f32 %v533, %v806
    %v808 = vpop.f32.mrb[0].mxu0
    %v809 = vadd.f32 %v537, %v808
    %810 = vmatprep.mubr.f32.mxu0 %v128
    %811 = vmatmul.mubr.f32.gmra.mrb[0].mxu0 %v127
    %v812 = vpop.f32.mrb[0].mxu0
    %v813 = vadd.f32 %v533, %v812
    %v814 = vpop.f32.mrb[0].mxu0
    %v815 = vadd.f32 %v537, %v814
    %816 = vmatprep.mubr.f32.mxu0 %v131
    %817 = vmatmul.mubr.f32.gmra.mrb[0].mxu0 %v130
    %v818 = vpop.f32.mrb[0].mxu0
    %v819 = vadd.f32 %v533, %v818
    %v820 = vpop.f32.mrb[0].mxu0
    %v821 = vadd.f32 %v537, %v820
    %822 = vmatprep.mubr.f32.mxu0 %v134
    %823 = vmatmul.mubr.f32.gmra.mrb[0].mxu0 %v133
    %v824 = vpop.f32.mrb[0].mxu0
    %v825 = vadd.f32 %v533, %v824
    %v826 = vpop.f32.mrb[0].mxu0
    %v827 = vadd.f32 %v537, %v826
    %828 = vdwg.mxu0
    %829 = vmatprep.subr.mxu0 %v395
    %830 = vmatpush1.msra.mxu0 %v394
    %831 = vmatprep.subr.mxu0 %v403
    %832 = vmatpush1.msra.mxu0 %v402
    %833 = vmatprep.subr.mxu0 %v411
    %834 = vmatpush1.msra.mxu0 %v410
    %835 = vmatprep.subr.mxu0 %v419
    %836 = vmatpush1.msra.mxu0 %v418
    %837 = vmatprep.subr.mxu0 %v427
    %838 = vmatpush1.msra.mxu0 %v426
    %839 = vmatprep.subr.mxu0 %v435
    %840 = vmatpush1.msra.mxu0 %v434
    %841 = vmatprep.subr.mxu0 %v443
    %842 = vmatpush1.msra.mxu0 %v442
    %843 = vmatprep.subr.mxu0 %v451
    %844 = vmatpush1.msra.mxu0 %v450
    %845 = vmatprep.subr.mxu0 %v459
    %846 = vmatpush1.msra.mxu0 %v458
    %847 = vmatprep.subr.mxu0 %v467
    %848 = vmatpush1.msra.mxu0 %v466
    %849 = vmatprep.subr.mxu0 %v475
    %850 = vmatpush1.msra.mxu0 %v474
    %851 = vmatprep.subr.mxu0 %v483
    %852 = vmatpush1.msra.mxu0 %v482
    %853 = vmatprep.subr.mxu0 %v491
    %854 = vmatpush1.msra.mxu0 %v490
    %855 = vmatprep.subr.mxu0 %v499
    %856 = vmatpush1.msra.mxu0 %v498
    %857 = vmatprep.subr.mxu0 %v507
    %858 = vmatpush1.msra.mxu0 %v506
    %859 = vmatprep.subr.mxu0 %v515
    %860 = vmatpush1.msra.mxu0 %v514
    %861 = vmatprep.subr.mxu0 0.0
    %862 = vmatpush1.msra.mxu0 0.0
    %863 = vmatprep.subr.mxu0 0.0
    %864 = vmatpush1.msra.mxu0 0.0
    %865 = vmatprep.subr.mxu0 0.0
    %866 = vmatpush1.msra.mxu0 0.0
    %867 = vmatprep.subr.mxu0 0.0
    %868 = vmatpush1.msra.mxu0 0.0
    %869 = vmatprep.subr.mxu0 0.0
    %870 = vmatpush1.msra.mxu0 0.0
    %871 = vmatprep.subr.mxu0 0.0
    %872 = vmatpush1.msra.mxu0 0.0
    %873 = vmatprep.subr.mxu0 0.0
    %874 = vmatpush1.msra.mxu0 0.0
    %875 = vmatprep.subr.mxu0 0.0
    %876 = vmatpush1.msra.mxu0 0.0
    %877 = vmatprep.subr.mxu0 0.0
    %878 = vmatpush1.msra.mxu0 0.0
    %879 = vmatprep.subr.mxu0 0.0
    %880 = vmatpush1.msra.mxu0 0.0
    %881 = vmatprep.subr.mxu0 0.0
    %882 = vmatpush1.msra.mxu0 0.0
    %883 = vmatprep.subr.mxu0 0.0
    %884 = vmatpush1.msra.mxu0 0.0
    %885 = vmatprep.subr.mxu0 0.0
    %886 = vmatpush1.msra.mxu0 0.0
    %887 = vmatprep.subr.mxu0 0.0
    %888 = vmatpush1.msra.mxu0 0.0
    %889 = vmatprep.subr.mxu0 0.0
    %890 = vmatpush1.msra.mxu0 0.0
    %891 = vmatprep.subr.mxu0 0.0
    %892 = vmatpush1.msra.mxu0 0.0
    %893 = vmatprep.mubr.f32.mxu0 0.0
    %894 = vmatmul.mubr.f32.gmra.mrb[0].mxu0 %v126
    %v895 = vpop.f32.mrb[0].mxu0
    %v896 = vadd.f32 %v807, %v895
    %v897 = vpop.f32.mrb[0].mxu0
    %v898 = vadd.f32 %v809, %v897
    %899 = vmatprep.mubr.f32.mxu0 0.0
    %900 = vmatmul.mubr.f32.gmra.mrb[0].mxu0 %v129
    %v901 = vpop.f32.mrb[0].mxu0
    %v902 = vadd.f32 %v813, %v901
    %v903 = vpop.f32.mrb[0].mxu0
    %v904 = vadd.f32 %v815, %v903
    %905 = vmatprep.mubr.f32.mxu0 0.0
    %906 = vmatmul.mubr.f32.gmra.mrb[0].mxu0 %v132
    %v907 = vpop.f32.mrb[0].mxu0
    %v908 = vadd.f32 %v819, %v907
    %v909 = vpop.f32.mrb[0].mxu0
    %v910 = vadd.f32 %v821, %v909
    %911 = vmatprep.mubr.f32.mxu0 0.0
    %912 = vmatmul.mubr.f32.gmra.mrb[0].mxu0 %v135
    %v913 = vpop.f32.mrb[0].mxu0
    %v914 = vadd.f32 %v825, %v913
    %v915 = vpop.f32.mrb[0].mxu0
    %v916 = vadd.f32 %v827, %v915
    %917 = vdwg.mxu0
    %918 = vmatprep.subr.mxu0 %v141
    %919 = vmatpush1.msra.mxu0 %v140
    %920 = vmatprep.subr.mxu0 %v149
    %921 = vmatpush1.msra.mxu0 %v148
    %922 = vmatprep.subr.mxu0 %v157
    %923 = vmatpush1.msra.mxu0 %v156
    %924 = vmatprep.subr.mxu0 %v165
    %925 = vmatpush1.msra.mxu0 %v164
    %926 = vmatprep.subr.mxu0 %v173
    %927 = vmatpush1.msra.mxu0 %v172
    %928 = vmatprep.subr.mxu0 %v181
    %929 = vmatpush1.msra.mxu0 %v180
    %930 = vmatprep.subr.mxu0 %v189
    %931 = vmatpush1.msra.mxu0 %v188
    %932 = vmatprep.subr.mxu0 %v197
    %933 = vmatpush1.msra.mxu0 %v196
    %934 = vmatprep.subr.mxu0 %v205
    %935 = vmatpush1.msra.mxu0 %v204
    %936 = vmatprep.subr.mxu0 %v213
    %937 = vmatpush1.msra.mxu0 %v212
    %938 = vmatprep.subr.mxu0 %v221
    %939 = vmatpush1.msra.mxu0 %v220
    %940 = vmatprep.subr.mxu0 %v229
    %941 = vmatpush1.msra.mxu0 %v228
    %942 = vmatprep.subr.mxu0 %v237
    %943 = vmatpush1.msra.mxu0 %v236
    %944 = vmatprep.subr.mxu0 %v245
    %945 = vmatpush1.msra.mxu0 %v244
    %946 = vmatprep.subr.mxu0 %v253
    %947 = vmatpush1.msra.mxu0 %v252
    %948 = vmatprep.subr.mxu0 %v261
    %949 = vmatpush1.msra.mxu0 %v260
    %950 = vmatprep.subr.mxu0 %v269
    %951 = vmatpush1.msra.mxu0 %v268
    %952 = vmatprep.subr.mxu0 %v277
    %953 = vmatpush1.msra.mxu0 %v276
    %954 = vmatprep.subr.mxu0 %v285
    %955 = vmatpush1.msra.mxu0 %v284
    %956 = vmatprep.subr.mxu0 %v293
    %957 = vmatpush1.msra.mxu0 %v292
    %958 = vmatprep.subr.mxu0 %v301
    %959 = vmatpush1.msra.mxu0 %v300
    %960 = vmatprep.subr.mxu0 %v309
    %961 = vmatpush1.msra.mxu0 %v308
    %962 = vmatprep.subr.mxu0 %v317
    %963 = vmatpush1.msra.mxu0 %v316
    %964 = vmatprep.subr.mxu0 %v325
    %965 = vmatpush1.msra.mxu0 %v324
    %966 = vmatprep.subr.mxu0 %v333
    %967 = vmatpush1.msra.mxu0 %v332
    %968 = vmatprep.subr.mxu0 %v341
    %969 = vmatpush1.msra.mxu0 %v340
    %970 = vmatprep.subr.mxu0 %v349
    %971 = vmatpush1.msra.mxu0 %v348
    %972 = vmatprep.subr.mxu0 %v357
    %973 = vmatpush1.msra.mxu0 %v356
    %974 = vmatprep.subr.mxu0 %v365
    %975 = vmatpush1.msra.mxu0 %v364
    %976 = vmatprep.subr.mxu0 %v373
    %977 = vmatpush1.msra.mxu0 %v372
    %978 = vmatprep.subr.mxu0 %v381
    %979 = vmatpush1.msra.mxu0 %v380
    %980 = vmatprep.subr.mxu0 %v389
    %981 = vmatpush1.msra.mxu0 %v388
    %982 = vmatprep.mubr.f32.mxu0 %v125
    %983 = vmatmul.mubr.f32.gmra.mrb[0].mxu0 %v124
    %v984 = vpop.f32.mrb[0].mxu0
    %v985 = vadd.f32 %v541, %v984
    %v986 = vpop.f32.mrb[0].mxu0
    %v987 = vadd.f32 %v545, %v986
    %988 = vmatprep.mubr.f32.mxu0 %v128
    %989 = vmatmul.mubr.f32.gmra.mrb[0].mxu0 %v127
    %v990 = vpop.f32.mrb[0].mxu0
    %v991 = vadd.f32 %v541, %v990
    %v992 = vpop.f32.mrb[0].mxu0
    %v993 = vadd.f32 %v545, %v992
    %994 = vmatprep.mubr.f32.mxu0 %v131
    %995 = vmatmul.mubr.f32.gmra.mrb[0].mxu0 %v130
    %v996 = vpop.f32.mrb[0].mxu0
    %v997 = vadd.f32 %v541, %v996
    %v998 = vpop.f32.mrb[0].mxu0
    %v999 = vadd.f32 %v545, %v998
    %1000 = vmatprep.mubr.f32.mxu0 %v134
    %1001 = vmatmul.mubr.f32.gmra.mrb[0].mxu0 %v133
    %v1002 = vpop.f32.mrb[0].mxu0
    %v1003 = vadd.f32 %v541, %v1002
    %v1004 = vpop.f32.mrb[0].mxu0
    %v1005 = vadd.f32 %v545, %v1004
    %1006 = vdwg.mxu0
    %1007 = vmatprep.subr.mxu0 %v397
    %1008 = vmatpush1.msra.mxu0 %v396
    %1009 = vmatprep.subr.mxu0 %v405
    %1010 = vmatpush1.msra.mxu0 %v404
    %1011 = vmatprep.subr.mxu0 %v413
    %1012 = vmatpush1.msra.mxu0 %v412
    %1013 = vmatprep.subr.mxu0 %v421
    %1014 = vmatpush1.msra.mxu0 %v420
    %1015 = vmatprep.subr.mxu0 %v429
    %1016 = vmatpush1.msra.mxu0 %v428
    %1017 = vmatprep.subr.mxu0 %v437
    %1018 = vmatpush1.msra.mxu0 %v436
    %1019 = vmatprep.subr.mxu0 %v445
    %1020 = vmatpush1.msra.mxu0 %v444
    %1021 = vmatprep.subr.mxu0 %v453
    %1022 = vmatpush1.msra.mxu0 %v452
    %1023 = vmatprep.subr.mxu0 %v461
    %1024 = vmatpush1.msra.mxu0 %v460
    %1025 = vmatprep.subr.mxu0 %v469
    %1026 = vmatpush1.msra.mxu0 %v468
    %1027 = vmatprep.subr.mxu0 %v477
    %1028 = vmatpush1.msra.mxu0 %v476
    %1029 = vmatprep.subr.mxu0 %v485
    %1030 = vmatpush1.msra.mxu0 %v484
    %1031 = vmatprep.subr.mxu0 %v493
    %1032 = vmatpush1.msra.mxu0 %v492
    %1033 = vmatprep.subr.mxu0 %v501
    %1034 = vmatpush1.msra.mxu0 %v500
    %1035 = vmatprep.subr.mxu0 %v509
    %1036 = vmatpush1.msra.mxu0 %v508
    %1037 = vmatprep.subr.mxu0 %v517
    %1038 = vmatpush1.msra.mxu0 %v516
    %1039 = vmatprep.subr.mxu0 0.0
    %1040 = vmatpush1.msra.mxu0 0.0
    %1041 = vmatprep.subr.mxu0 0.0
    %1042 = vmatpush1.msra.mxu0 0.0
    %1043 = vmatprep.subr.mxu0 0.0
    %1044 = vmatpush1.msra.mxu0 0.0
    %1045 = vmatprep.subr.mxu0 0.0
    %1046 = vmatpush1.msra.mxu0 0.0
    %1047 = vmatprep.subr.mxu0 0.0
    %1048 = vmatpush1.msra.mxu0 0.0
    %1049 = vmatprep.subr.mxu0 0.0
    %1050 = vmatpush1.msra.mxu0 0.0
    %1051 = vmatprep.subr.mxu0 0.0
    %1052 = vmatpush1.msra.mxu0 0.0
    %1053 = vmatprep.subr.mxu0 0.0
    %1054 = vmatpush1.msra.mxu0 0.0
    %1055 = vmatprep.subr.mxu0 0.0
    %1056 = vmatpush1.msra.mxu0 0.0
    %1057 = vmatprep.subr.mxu0 0.0
    %1058 = vmatpush1.msra.mxu0 0.0
    %1059 = vmatprep.subr.mxu0 0.0
    %1060 = vmatpush1.msra.mxu0 0.0
    %1061 = vmatprep.subr.mxu0 0.0
    %1062 = vmatpush1.msra.mxu0 0.0
    %1063 = vmatprep.subr.mxu0 0.0
    %1064 = vmatpush1.msra.mxu0 0.0
    %1065 = vmatprep.subr.mxu0 0.0
    %1066 = vmatpush1.msra.mxu0 0.0
    %1067 = vmatprep.subr.mxu0 0.0
    %1068 = vmatpush1.msra.mxu0 0.0
    %1069 = vmatprep.subr.mxu0 0.0
    %1070 = vmatpush1.msra.mxu0 0.0
    %1071 = vmatprep.mubr.f32.mxu0 0.0
    %1072 = vmatmul.mubr.f32.gmra.mrb[0].mxu0 %v126
    %v1073 = vpop.f32.mrb[0].mxu0
    %v1074 = vadd.f32 %v985, %v1073
    %v1075 = vpop.f32.mrb[0].mxu0
    %v1076 = vadd.f32 %v987, %v1075
    %1077 = vmatprep.mubr.f32.mxu0 0.0
    %1078 = vmatmul.mubr.f32.gmra.mrb[0].mxu0 %v129
    %v1079 = vpop.f32.mrb[0].mxu0
    %v1080 = vadd.f32 %v991, %v1079
    %v1081 = vpop.f32.mrb[0].mxu0
    %v1082 = vadd.f32 %v993, %v1081
    %1083 = vmatprep.mubr.f32.mxu0 0.0
    %1084 = vmatmul.mubr.f32.gmra.mrb[0].mxu0 %v132
    %v1085 = vpop.f32.mrb[0].mxu0
    %v1086 = vadd.f32 %v997, %v1085
    %v1087 = vpop.f32.mrb[0].mxu0
    %v1088 = vadd.f32 %v999, %v1087
    %1089 = vmatprep.mubr.f32.mxu0 0.0
    %1090 = vmatmul.mubr.f32.gmra.mrb[0].mxu0 %v135
    %v1091 = vpop.f32.mrb[0].mxu0
    %v1092 = vadd.f32 %v1003, %v1091
    %v1093 = vpop.f32.mrb[0].mxu0
    %v1094 = vadd.f32 %v1005, %v1093
    %1095 = vdwg.mxu0
    %1096 = vmatprep.subr.mxu0 %v143
    %1097 = vmatpush1.msra.mxu0 %v142
    %1098 = vmatprep.subr.mxu0 %v151
    %1099 = vmatpush1.msra.mxu0 %v150
    %1100 = vmatprep.subr.mxu0 %v159
    %1101 = vmatpush1.msra.mxu0 %v158
    %1102 = vmatprep.subr.mxu0 %v167
    %1103 = vmatpush1.msra.mxu0 %v166
    %1104 = vmatprep.subr.mxu0 %v175
    %1105 = vmatpush1.msra.mxu0 %v174
    %1106 = vmatprep.subr.mxu0 %v183
    %1107 = vmatpush1.msra.mxu0 %v182
    %1108 = vmatprep.subr.mxu0 %v191
    %1109 = vmatpush1.msra.mxu0 %v190
    %1110 = vmatprep.subr.mxu0 %v199
    %1111 = vmatpush1.msra.mxu0 %v198
    %1112 = vmatprep.subr.mxu0 %v207
    %1113 = vmatpush1.msra.mxu0 %v206
    %1114 = vmatprep.subr.mxu0 %v215
    %1115 = vmatpush1.msra.mxu0 %v214
    %1116 = vmatprep.subr.mxu0 %v223
    %1117 = vmatpush1.msra.mxu0 %v222
    %1118 = vmatprep.subr.mxu0 %v231
    %1119 = vmatpush1.msra.mxu0 %v230
    %1120 = vmatprep.subr.mxu0 %v239
    %1121 = vmatpush1.msra.mxu0 %v238
    %1122 = vmatprep.subr.mxu0 %v247
    %1123 = vmatpush1.msra.mxu0 %v246
    %1124 = vmatprep.subr.mxu0 %v255
    %1125 = vmatpush1.msra.mxu0 %v254
    %1126 = vmatprep.subr.mxu0 %v263
    %1127 = vmatpush1.msra.mxu0 %v262
    %1128 = vmatprep.subr.mxu0 %v271
    %1129 = vmatpush1.msra.mxu0 %v270
    %1130 = vmatprep.subr.mxu0 %v279
    %1131 = vmatpush1.msra.mxu0 %v278
    %1132 = vmatprep.subr.mxu0 %v287
    %1133 = vmatpush1.msra.mxu0 %v286
    %1134 = vmatprep.subr.mxu0 %v295
    %1135 = vmatpush1.msra.mxu0 %v294
    %1136 = vmatprep.subr.mxu0 %v303
    %1137 = vmatpush1.msra.mxu0 %v302
    %1138 = vmatprep.subr.mxu0 %v311
    %1139 = vmatpush1.msra.mxu0 %v310
    %1140 = vmatprep.subr.mxu0 %v319
    %1141 = vmatpush1.msra.mxu0 %v318
    %1142 = vmatprep.subr.mxu0 %v327
    %1143 = vmatpush1.msra.mxu0 %v326
    %1144 = vmatprep.subr.mxu0 %v335
    %1145 = vmatpush1.msra.mxu0 %v334
    %1146 = vmatprep.subr.mxu0 %v343
    %1147 = vmatpush1.msra.mxu0 %v342
    %1148 = vmatprep.subr.mxu0 %v351
    %1149 = vmatpush1.msra.mxu0 %v350
    %1150 = vmatprep.subr.mxu0 %v359
    %1151 = vmatpush1.msra.mxu0 %v358
    %1152 = vmatprep.subr.mxu0 %v367
    %1153 = vmatpush1.msra.mxu0 %v366
    %1154 = vmatprep.subr.mxu0 %v375
    %1155 = vmatpush1.msra.mxu0 %v374
    %1156 = vmatprep.subr.mxu0 %v383
    %1157 = vmatpush1.msra.mxu0 %v382
    %1158 = vmatprep.subr.mxu0 %v391
    %1159 = vmatpush1.msra.mxu0 %v390
    %1160 = vmatprep.mubr.f32.mxu0 %v125
    %1161 = vmatmul.mubr.f32.gmra.mrb[0].mxu0 %v124
    %v1162 = vpop.f32.mrb[0].mxu0
    %v1163 = vadd.f32 %v549, %v1162
    %v1164 = vpop.f32.mrb[0].mxu0
    %v1165 = vadd.f32 %v553, %v1164
    %1166 = vmatprep.mubr.f32.mxu0 %v128
    %1167 = vmatmul.mubr.f32.gmra.mrb[0].mxu0 %v127
    %v1168 = vpop.f32.mrb[0].mxu0
    %v1169 = vadd.f32 %v549, %v1168
    %v1170 = vpop.f32.mrb[0].mxu0
    %v1171 = vadd.f32 %v553, %v1170
    %1172 = vmatprep.mubr.f32.mxu0 %v131
    %1173 = vmatmul.mubr.f32.gmra.mrb[0].mxu0 %v130
    %v1174 = vpop.f32.mrb[0].mxu0
    %v1175 = vadd.f32 %v549, %v1174
    %v1176 = vpop.f32.mrb[0].mxu0
    %v1177 = vadd.f32 %v553, %v1176
    %1178 = vmatprep.mubr.f32.mxu0 %v134
    %1179 = vmatmul.mubr.f32.gmra.mrb[0].mxu0 %v133
    %v1180 = vpop.f32.mrb[0].mxu0
    %v1181 = vadd.f32 %v549, %v1180
    %v1182 = vpop.f32.mrb[0].mxu0
    %v1183 = vadd.f32 %v553, %v1182
    %1184 = vdwg.mxu0
    %1185 = vmatprep.subr.mxu0 %v399
    %1186 = vmatpush1.msra.mxu0 %v398
    %1187 = vmatprep.subr.mxu0 %v407
    %1188 = vmatpush1.msra.mxu0 %v406
    %1189 = vmatprep.subr.mxu0 %v415
    %1190 = vmatpush1.msra.mxu0 %v414
    %1191 = vmatprep.subr.mxu0 %v423
    %1192 = vmatpush1.msra.mxu0 %v422
    %1193 = vmatprep.subr.mxu0 %v431
    %1194 = vmatpush1.msra.mxu0 %v430
    %1195 = vmatprep.subr.mxu0 %v439
    %1196 = vmatpush1.msra.mxu0 %v438
    %1197 = vmatprep.subr.mxu0 %v447
    %1198 = vmatpush1.msra.mxu0 %v446
    %1199 = vmatprep.subr.mxu0 %v455
    %1200 = vmatpush1.msra.mxu0 %v454
    %1201 = vmatprep.subr.mxu0 %v463
    %1202 = vmatpush1.msra.mxu0 %v462
    %1203 = vmatprep.subr.mxu0 %v471
    %1204 = vmatpush1.msra.mxu0 %v470
    %1205 = vmatprep.subr.mxu0 %v479
    %1206 = vmatpush1.msra.mxu0 %v478
    %1207 = vmatprep.subr.mxu0 %v487
    %1208 = vmatpush1.msra.mxu0 %v486
    %1209 = vmatprep.subr.mxu0 %v495
    %1210 = vmatpush1.msra.mxu0 %v494
    %1211 = vmatprep.subr.mxu0 %v503
    %1212 = vmatpush1.msra.mxu0 %v502
    %1213 = vmatprep.subr.mxu0 %v511
    %1214 = vmatpush1.msra.mxu0 %v510
    %1215 = vmatprep.subr.mxu0 %v519
    %1216 = vmatpush1.msra.mxu0 %v518
    %1217 = vmatprep.subr.mxu0 0.0
    %1218 = vmatpush1.msra.mxu0 0.0
    %1219 = vmatprep.subr.mxu0 0.0
    %1220 = vmatpush1.msra.mxu0 0.0
    %1221 = vmatprep.subr.mxu0 0.0
    %1222 = vmatpush1.msra.mxu0 0.0
    %1223 = vmatprep.subr.mxu0 0.0
    %1224 = vmatpush1.msra.mxu0 0.0
    %1225 = vmatprep.subr.mxu0 0.0
    %1226 = vmatpush1.msra.mxu0 0.0
    %1227 = vmatprep.subr.mxu0 0.0
    %1228 = vmatpush1.msra.mxu0 0.0
    %1229 = vmatprep.subr.mxu0 0.0
    %1230 = vmatpush1.msra.mxu0 0.0
    %1231 = vmatprep.subr.mxu0 0.0
    %1232 = vmatpush1.msra.mxu0 0.0
    %1233 = vmatprep.subr.mxu0 0.0
    %1234 = vmatpush1.msra.mxu0 0.0
    %1235 = vmatprep.subr.mxu0 0.0
    %1236 = vmatpush1.msra.mxu0 0.0
    %1237 = vmatprep.subr.mxu0 0.0
    %1238 = vmatpush1.msra.mxu0 0.0
    %1239 = vmatprep.subr.mxu0 0.0
    %1240 = vmatpush1.msra.mxu0 0.0
    %1241 = vmatprep.subr.mxu0 0.0
    %1242 = vmatpush1.msra.mxu0 0.0
    %1243 = vmatprep.subr.mxu0 0.0
    %1244 = vmatpush1.msra.mxu0 0.0
    %1245 = vmatprep.subr.mxu0 0.0
    %1246 = vmatpush1.msra.mxu0 0.0
    %1247 = vmatprep.subr.mxu0 0.0
    %1248 = vmatpush1.msra.mxu0 0.0
    %1249 = vmatprep.mubr.f32.mxu0 0.0
    %1250 = vmatmul.mubr.f32.gmra.mrb[0].mxu0 %v126
    %v1251 = vpop.f32.mrb[0].mxu0
    %v1252 = vadd.f32 %v1163, %v1251
    %v1253 = vpop.f32.mrb[0].mxu0
    %v1254 = vadd.f32 %v1165, %v1253
    %1255 = vmatprep.mubr.f32.mxu0 0.0
    %1256 = vmatmul.mubr.f32.gmra.mrb[0].mxu0 %v129
    %v1257 = vpop.f32.mrb[0].mxu0
    %v1258 = vadd.f32 %v1169, %v1257
    %v1259 = vpop.f32.mrb[0].mxu0
    %v1260 = vadd.f32 %v1171, %v1259
    %1261 = vmatprep.mubr.f32.mxu0 0.0
    %1262 = vmatmul.mubr.f32.gmra.mrb[0].mxu0 %v132
    %v1263 = vpop.f32.mrb[0].mxu0
    %v1264 = vadd.f32 %v1175, %v1263
    %v1265 = vpop.f32.mrb[0].mxu0
    %v1266 = vadd.f32 %v1177, %v1265
    %1267 = vmatprep.mubr.f32.mxu0 0.0
    %1268 = vmatmul.mubr.f32.gmra.mrb[0].mxu0 %v135
    %v1269 = vpop.f32.mrb[0].mxu0
    %v1270 = vadd.f32 %v1181, %v1269
    %v1271 = vpop.f32.mrb[0].mxu0
    %v1272 = vadd.f32 %v1183, %v1271
    %1273 = vdwg.mxu0
    %v1274 = vmax.f32 %v718, 0.0
    %v1275 = vmax.f32 %v720, 0.0
    %v1276 = vmax.f32 %v896, 0.0
    %v1277 = vmax.f32 %v898, 0.0
    %v1278 = vmax.f32 %v1074, 0.0
    %v1279 = vmax.f32 %v1076, 0.0
    %v1280 = vmax.f32 %v1252, 0.0
    %v1281 = vmax.f32 %v1254, 0.0
    %v1282 = vmax.f32 %v724, 0.0
    %v1283 = vmax.f32 %v726, 0.0
    %v1284 = vmax.f32 %v902, 0.0
    %v1285 = vmax.f32 %v904, 0.0
    %v1286 = vmax.f32 %v1080, 0.0
    %v1287 = vmax.f32 %v1082, 0.0
    %v1288 = vmax.f32 %v1258, 0.0
    %v1289 = vmax.f32 %v1260, 0.0
    %v1290 = vmax.f32 %v730, 0.0
    %v1291 = vmax.f32 %v732, 0.0
    %v1292 = vmax.f32 %v908, 0.0
    %v1293 = vmax.f32 %v910, 0.0
    %v1294 = vmax.f32 %v1086, 0.0
    %v1295 = vmax.f32 %v1088, 0.0
    %v1296 = vmax.f32 %v1264, 0.0
    %v1297 = vmax.f32 %v1266, 0.0
    %v1298 = vmax.f32 %v736, 0.0
    %v1299 = vmax.f32 %v738, 0.0
    %v1300 = vmax.f32 %v914, 0.0
    %v1301 = vmax.f32 %v916, 0.0
    %v1302 = vmax.f32 %v1092, 0.0
    %v1303 = vmax.f32 %v1094, 0.0
    %v1304 = vmax.f32 %v1270, 0.0
    %v1305 = vmax.f32 %v1272, 0.0
    %v1306 = vld [vmem:[%s3] sm:$0xff]
    %v1307 = vld [vmem:[%s3 + $0x8] sm:$0xff]
    %v1308 = vld [vmem:[%s3 + $0x10] sm:$0xff]
    %v1309 = vld [vmem:[%s3 + $0x18] sm:$0xff]
    %v1310 = vld [vmem:[%s3 + $0x20] sm:$0xff]
    %v1311 = vld [vmem:[%s3 + $0x28] sm:$0xff]
    %v1312 = vld [vmem:[%s3 + $0x30] sm:$0xff]
    %v1313 = vld [vmem:[%s3 + $0x38] sm:$0xff]
    %v1314 = vld [vmem:[%s3 + $0x40] sm:$0xff]
    %v1315 = vld [vmem:[%s3 + $0x48] sm:$0xff]
    %v1316 = vld [vmem:[%s3 + $0x50] sm:$0xff]
    %v1317 = vld [vmem:[%s3 + $0x58] sm:$0xff]
    %v1318 = vld [vmem:[%s3 + $0x60] sm:$0xff]
    %v1319 = vld [vmem:[%s3 + $0x68] sm:$0xff]
    %v1320 = vld [vmem:[%s3 + $0x70] sm:$0xff]
    %v1321 = vld [vmem:[%s3 + $0x78] sm:$0xff]
    %v1322 = vld [vmem:[%s3 + $0x80] sm:$0xff]
    %v1323 = vld [vmem:[%s3 + $0x88] sm:$0xff]
    %v1324 = vld [vmem:[%s3 + $0x90] sm:$0xff]
    %v1325 = vld [vmem:[%s3 + $0x98] sm:$0xff]
    %v1326 = vld [vmem:[%s3 + $0xa0] sm:$0xff]
    %v1327 = vld [vmem:[%s3 + $0xa8] sm:$0xff]
    %v1328 = vld [vmem:[%s3 + $0xb0] sm:$0xff]
    %v1329 = vld [vmem:[%s3 + $0xb8] sm:$0xff]
    %v1330 = vld [vmem:[%s3 + $0xc0] sm:$0xff]
    %v1331 = vld [vmem:[%s3 + $0xc8] sm:$0xff]
    %v1332 = vld [vmem:[%s3 + $0xd0] sm:$0xff]
    %v1333 = vld [vmem:[%s3 + $0xd8] sm:$0xff]
    %v1334 = vld [vmem:[%s3 + $0xe0] sm:$0xff]
    %v1335 = vld [vmem:[%s3 + $0xe8] sm:$0xff]
    %v1336 = vld [vmem:[%s3 + $0xf0] sm:$0xff]
    %v1337 = vld [vmem:[%s3 + $0xf8] sm:$0xff]
    %v1338 = vld [vmem:[%s3 + $0x100] sm:$0xff]
    %v1339 = vld [vmem:[%s3 + $0x108] sm:$0xff]
    %v1340 = vld [vmem:[%s3 + $0x110] sm:$0xff]
    %v1341 = vld [vmem:[%s3 + $0x118] sm:$0xff]
    %v1342 = vld [vmem:[%s3 + $0x120] sm:$0xff]
    %v1343 = vld [vmem:[%s3 + $0x128] sm:$0xff]
    %v1344 = vld [vmem:[%s3 + $0x130] sm:$0xff]
    %v1345 = vld [vmem:[%s3 + $0x138] sm:$0xff]
    %v1346 = vld [vmem:[%s3 + $0x140] sm:$0xff]
    %v1347 = vld [vmem:[%s3 + $0x148] sm:$0xff]
    %v1348 = vld [vmem:[%s3 + $0x150] sm:$0xff]
    %v1349 = vld [vmem:[%s3 + $0x158] sm:$0xff]
    %v1350 = vld [vmem:[%s3 + $0x160] sm:$0xff]
    %v1351 = vld [vmem:[%s3 + $0x168] sm:$0xff]
    %v1352 = vld [vmem:[%s3 + $0x170] sm:$0xff]
    %v1353 = vld [vmem:[%s3 + $0x178] sm:$0xff]
    %v1354 = vld [vmem:[%s3 + $0x180] sm:$0xff]
    %v1355 = vld [vmem:[%s3 + $0x188] sm:$0xff]
    %v1356 = vld [vmem:[%s3 + $0x190] sm:$0xff]
    %v1357 = vld [vmem:[%s3 + $0x198] sm:$0xff]
    %v1358 = vld [vmem:[%s3 + $0x1a0] sm:$0xff]
    %v1359 = vld [vmem:[%s3 + $0x1a8] sm:$0xff]
    %v1360 = vld [vmem:[%s3 + $0x1b0] sm:$0xff]
    %v1361 = vld [vmem:[%s3 + $0x1b8] sm:$0xff]
    %v1362 = vld [vmem:[%s3 + $0x1c0] sm:$0xff]
    %v1363 = vld [vmem:[%s3 + $0x1c8] sm:$0xff]
    %v1364 = vld [vmem:[%s3 + $0x1d0] sm:$0xff]
    %v1365 = vld [vmem:[%s3 + $0x1d8] sm:$0xff]
    %v1366 = vld [vmem:[%s3 + $0x1e0] sm:$0xff]
    %v1367 = vld [vmem:[%s3 + $0x1e8] sm:$0xff]
    %v1368 = vld [vmem:[%s3 + $0x1f0] sm:$0xff]
    %v1369 = vld [vmem:[%s3 + $0x1f8] sm:$0xff]
    %v1370 = vld [vmem:[%s3 + $0x200] sm:$0xff]
    %v1371 = vld [vmem:[%s3 + $0x208] sm:$0xff]
    %v1372 = vld [vmem:[%s3 + $0x210] sm:$0xff]
    %v1373 = vld [vmem:[%s3 + $0x218] sm:$0xff]
    %v1374 = vld [vmem:[%s3 + $0x220] sm:$0xff]
    %v1375 = vld [vmem:[%s3 + $0x228] sm:$0xff]
    %v1376 = vld [vmem:[%s3 + $0x230] sm:$0xff]
    %v1377 = vld [vmem:[%s3 + $0x238] sm:$0xff]
    %v1378 = vld [vmem:[%s3 + $0x240] sm:$0xff]
    %v1379 = vld [vmem:[%s3 + $0x248] sm:$0xff]
    %v1380 = vld [vmem:[%s3 + $0x250] sm:$0xff]
    %v1381 = vld [vmem:[%s3 + $0x258] sm:$0xff]
    %v1382 = vld [vmem:[%s3 + $0x260] sm:$0xff]
    %v1383 = vld [vmem:[%s3 + $0x268] sm:$0xff]
    %v1384 = vld [vmem:[%s3 + $0x270] sm:$0xff]
    %v1385 = vld [vmem:[%s3 + $0x278] sm:$0xff]
    %v1386 = vld [vmem:[%s3 + $0x280] sm:$0xff]
    %v1387 = vld [vmem:[%s3 + $0x288] sm:$0xff]
    %v1388 = vld [vmem:[%s3 + $0x290] sm:$0xff]
    %v1389 = vld [vmem:[%s3 + $0x298] sm:$0xff]
    %v1390 = vld [vmem:[%s3 + $0x2a0] sm:$0xff]
    %v1391 = vld [vmem:[%s3 + $0x2a8] sm:$0xff]
    %v1392 = vld [vmem:[%s3 + $0x2b0] sm:$0xff]
    %v1393 = vld [vmem:[%s3 + $0x2b8] sm:$0xff]
    %v1394 = vld [vmem:[%s3 + $0x2c0] sm:$0xff]
    %v1395 = vld [vmem:[%s3 + $0x2c8] sm:$0xff]
    %v1396 = vld [vmem:[%s3 + $0x2d0] sm:$0xff]
    %v1397 = vld [vmem:[%s3 + $0x2d8] sm:$0xff]
    %v1398 = vld [vmem:[%s3 + $0x2e0] sm:$0xff]
    %v1399 = vld [vmem:[%s3 + $0x2e8] sm:$0xff]
    %v1400 = vld [vmem:[%s3 + $0x2f0] sm:$0xff]
    %v1401 = vld [vmem:[%s3 + $0x2f8] sm:$0xff]
    %v1402 = vld [vmem:[%s3 + $0x300] sm:$0xff]
    %v1403 = vld [vmem:[%s3 + $0x308] sm:$0xff]
    %v1404 = vld [vmem:[%s3 + $0x310] sm:$0xff]
    %v1405 = vld [vmem:[%s3 + $0x318] sm:$0xff]
    %v1406 = vld [vmem:[%s3 + $0x320] sm:$0xff]
    %v1407 = vld [vmem:[%s3 + $0x328] sm:$0xff]
    %v1408 = vld [vmem:[%s3 + $0x330] sm:$0xff]
    %v1409 = vld [vmem:[%s3 + $0x338] sm:$0xff]
    %v1410 = vld [vmem:[%s3 + $0x340] sm:$0xff]
    %v1411 = vld [vmem:[%s3 + $0x348] sm:$0xff]
    %v1412 = vld [vmem:[%s3 + $0x350] sm:$0xff]
    %v1413 = vld [vmem:[%s3 + $0x358] sm:$0xff]
    %v1414 = vld [vmem:[%s3 + $0x360] sm:$0xff]
    %v1415 = vld [vmem:[%s3 + $0x368] sm:$0xff]
    %v1416 = vld [vmem:[%s3 + $0x370] sm:$0xff]
    %v1417 = vld [vmem:[%s3 + $0x378] sm:$0xff]
    %v1418 = vld [vmem:[%s3 + $0x380] sm:$0xff]
    %v1419 = vld [vmem:[%s3 + $0x388] sm:$0xff]
    %v1420 = vld [vmem:[%s3 + $0x390] sm:$0xff]
    %v1421 = vld [vmem:[%s3 + $0x398] sm:$0xff]
    %v1422 = vld [vmem:[%s3 + $0x3a0] sm:$0xff]
    %v1423 = vld [vmem:[%s3 + $0x3a8] sm:$0xff]
    %v1424 = vld [vmem:[%s3 + $0x3b0] sm:$0xff]
    %v1425 = vld [vmem:[%s3 + $0x3b8] sm:$0xff]
    %v1426 = vld [vmem:[%s3 + $0x3c0] sm:$0xff]
    %v1427 = vld [vmem:[%s3 + $0x3c8] sm:$0xff]
    %v1428 = vld [vmem:[%s3 + $0x3d0] sm:$0xff]
    %v1429 = vld [vmem:[%s3 + $0x3d8] sm:$0xff]
    %v1430 = vld [vmem:[%s3 + $0x3e0] sm:$0xff]
    %v1431 = vld [vmem:[%s3 + $0x3e8] sm:$0xff]
    %v1432 = vld [vmem:[%s3 + $0x3f0] sm:$0xff]
    %v1433 = vld [vmem:[%s3 + $0x3f8] sm:$0xff]
    %1434 = vmatprep.subr.mxu0 0.0
    %1435 = vmatpush1.msra.mxu0 %v1306
    %1436 = vmatprep.subr.mxu0 0.0
    %1437 = vmatpush1.msra.mxu0 %v1307
    %1438 = vmatprep.subr.mxu0 0.0
    %1439 = vmatpush1.msra.mxu0 %v1308
    %1440 = vmatprep.subr.mxu0 0.0
    %1441 = vmatpush1.msra.mxu0 %v1309
    %1442 = vmatprep.subr.mxu0 0.0
    %1443 = vmatpush1.msra.mxu0 %v1310
    %1444 = vmatprep.subr.mxu0 0.0
    %1445 = vmatpush1.msra.mxu0 %v1311
    %1446 = vmatprep.subr.mxu0 0.0
    %1447 = vmatpush1.msra.mxu0 %v1312
    %1448 = vmatprep.subr.mxu0 0.0
    %1449 = vmatpush1.msra.mxu0 %v1313
    %1450 = vmatprep.subr.mxu0 0.0
    %1451 = vmatpush1.msra.mxu0 %v1314
    %1452 = vmatprep.subr.mxu0 0.0
    %1453 = vmatpush1.msra.mxu0 %v1315
    %1454 = vmatprep.subr.mxu0 0.0
    %1455 = vmatpush1.msra.mxu0 %v1316
    %1456 = vmatprep.subr.mxu0 0.0
    %1457 = vmatpush1.msra.mxu0 %v1317
    %1458 = vmatprep.subr.mxu0 0.0
    %1459 = vmatpush1.msra.mxu0 %v1318
    %1460 = vmatprep.subr.mxu0 0.0
    %1461 = vmatpush1.msra.mxu0 %v1319
    %1462 = vmatprep.subr.mxu0 0.0
    %1463 = vmatpush1.msra.mxu0 %v1320
    %1464 = vmatprep.subr.mxu0 0.0
    %1465 = vmatpush1.msra.mxu0 %v1321
    %1466 = vmatprep.subr.mxu0 0.0
    %1467 = vmatpush1.msra.mxu0 %v1322
    %1468 = vmatprep.subr.mxu0 0.0
    %1469 = vmatpush1.msra.mxu0 %v1323
    %1470 = vmatprep.subr.mxu0 0.0
    %1471 = vmatpush1.msra.mxu0 %v1324
    %1472 = vmatprep.subr.mxu0 0.0
    %1473 = vmatpush1.msra.mxu0 %v1325
    %1474 = vmatprep.subr.mxu0 0.0
    %1475 = vmatpush1.msra.mxu0 %v1326
    %1476 = vmatprep.subr.mxu0 0.0
    %1477 = vmatpush1.msra.mxu0 %v1327
    %1478 = vmatprep.subr.mxu0 0.0
    %1479 = vmatpush1.msra.mxu0 %v1328
    %1480 = vmatprep.subr.mxu0 0.0
    %1481 = vmatpush1.msra.mxu0 %v1329
    %1482 = vmatprep.subr.mxu0 0.0
    %1483 = vmatpush1.msra.mxu0 %v1330
    %1484 = vmatprep.subr.mxu0 0.0
    %1485 = vmatpush1.msra.mxu0 %v1331
    %1486 = vmatprep.subr.mxu0 0.0
    %1487 = vmatpush1.msra.mxu0 %v1332
    %1488 = vmatprep.subr.mxu0 0.0
    %1489 = vmatpush1.msra.mxu0 %v1333
    %1490 = vmatprep.subr.mxu0 0.0
    %1491 = vmatpush1.msra.mxu0 %v1334
    %1492 = vmatprep.subr.mxu0 0.0
    %1493 = vmatpush1.msra.mxu0 %v1335
    %1494 = vmatprep.subr.mxu0 0.0
    %1495 = vmatpush1.msra.mxu0 %v1336
    %1496 = vmatprep.subr.mxu0 0.0
    %1497 = vmatpush1.msra.mxu0 %v1337
    %1498 = vmatprep.mubr.f32.mxu0 %v1275
    %1499 = vmatmul.mubr.f32.gmra.mrb[0].mxu0 %v1274
    %v1500 = vpop.f32.mrb[0].mxu0
    %v1501 = vadd.f32 0.0, %v1500
    %v1502 = vpop.f32.mrb[0].mxu0
    %1503 = vmatprep.mubr.f32.mxu0 %v1283
    %1504 = vmatmul.mubr.f32.gmra.mrb[0].mxu0 %v1282
    %v1505 = vpop.f32.mrb[0].mxu0
    %v1506 = vadd.f32 0.0, %v1505
    %v1507 = vpop.f32.mrb[0].mxu0
    %1508 = vmatprep.mubr.f32.mxu0 %v1291
    %1509 = vmatmul.mubr.f32.gmra.mrb[0].mxu0 %v1290
    %v1510 = vpop.f32.mrb[0].mxu0
    %v1511 = vadd.f32 0.0, %v1510
    %v1512 = vpop.f32.mrb[0].mxu0
    %1513 = vmatprep.mubr.f32.mxu0 %v1299
    %1514 = vmatmul.mubr.f32.gmra.mrb[0].mxu0 %v1298
    %v1515 = vpop.f32.mrb[0].mxu0
    %v1516 = vadd.f32 0.0, %v1515
    %v1517 = vpop.f32.mrb[0].mxu0
    %1518 = vdwg.mxu0
    %1519 = vmatprep.subr.mxu0 0.0
    %1520 = vmatpush1.msra.mxu0 %v1338
    %1521 = vmatprep.subr.mxu0 0.0
    %1522 = vmatpush1.msra.mxu0 %v1339
    %1523 = vmatprep.subr.mxu0 0.0
    %1524 = vmatpush1.msra.mxu0 %v1340
    %1525 = vmatprep.subr.mxu0 0.0
    %1526 = vmatpush1.msra.mxu0 %v1341
    %1527 = vmatprep.subr.mxu0 0.0
    %1528 = vmatpush1.msra.mxu0 %v1342
    %1529 = vmatprep.subr.mxu0 0.0
    %1530 = vmatpush1.msra.mxu0 %v1343
    %1531 = vmatprep.subr.mxu0 0.0
    %1532 = vmatpush1.msra.mxu0 %v1344
    %1533 = vmatprep.subr.mxu0 0.0
    %1534 = vmatpush1.msra.mxu0 %v1345
    %1535 = vmatprep.subr.mxu0 0.0
    %1536 = vmatpush1.msra.mxu0 %v1346
    %1537 = vmatprep.subr.mxu0 0.0
    %1538 = vmatpush1.msra.mxu0 %v1347
    %1539 = vmatprep.subr.mxu0 0.0
    %1540 = vmatpush1.msra.mxu0 %v1348
    %1541 = vmatprep.subr.mxu0 0.0
    %1542 = vmatpush1.msra.mxu0 %v1349
    %1543 = vmatprep.subr.mxu0 0.0
    %1544 = vmatpush1.msra.mxu0 %v1350
    %1545 = vmatprep.subr.mxu0 0.0
    %1546 = vmatpush1.msra.mxu0 %v1351
    %1547 = vmatprep.subr.mxu0 0.0
    %1548 = vmatpush1.msra.mxu0 %v1352
    %1549 = vmatprep.subr.mxu0 0.0
    %1550 = vmatpush1.msra.mxu0 %v1353
    %1551 = vmatprep.subr.mxu0 0.0
    %1552 = vmatpush1.msra.mxu0 %v1354
    %1553 = vmatprep.subr.mxu0 0.0
    %1554 = vmatpush1.msra.mxu0 %v1355
    %1555 = vmatprep.subr.mxu0 0.0
    %1556 = vmatpush1.msra.mxu0 %v1356
    %1557 = vmatprep.subr.mxu0 0.0
    %1558 = vmatpush1.msra.mxu0 %v1357
    %1559 = vmatprep.subr.mxu0 0.0
    %1560 = vmatpush1.msra.mxu0 %v1358
    %1561 = vmatprep.subr.mxu0 0.0
    %1562 = vmatpush1.msra.mxu0 %v1359
    %1563 = vmatprep.subr.mxu0 0.0
    %1564 = vmatpush1.msra.mxu0 %v1360
    %1565 = vmatprep.subr.mxu0 0.0
    %1566 = vmatpush1.msra.mxu0 %v1361
    %1567 = vmatprep.subr.mxu0 0.0
    %1568 = vmatpush1.msra.mxu0 %v1362
    %1569 = vmatprep.subr.mxu0 0.0
    %1570 = vmatpush1.msra.mxu0 %v1363
    %1571 = vmatprep.subr.mxu0 0.0
    %1572 = vmatpush1.msra.mxu0 %v1364
    %1573 = vmatprep.subr.mxu0 0.0
    %1574 = vmatpush1.msra.mxu0 %v1365
    %1575 = vmatprep.subr.mxu0 0.0
    %1576 = vmatpush1.msra.mxu0 %v1366
    %1577 = vmatprep.subr.mxu0 0.0
    %1578 = vmatpush1.msra.mxu0 %v1367
    %1579 = vmatprep.subr.mxu0 0.0
    %1580 = vmatpush1.msra.mxu0 %v1368
    %1581 = vmatprep.subr.mxu0 0.0
    %1582 = vmatpush1.msra.mxu0 %v1369
    %1583 = vmatprep.mubr.f32.mxu0 %v1277
    %1584 = vmatmul.mubr.f32.gmra.mrb[0].mxu0 %v1276
    %v1585 = vpop.f32.mrb[0].mxu0
    %v1586 = vadd.f32 %v1501, %v1585
    %v1587 = vpop.f32.mrb[0].mxu0
    %1588 = vmatprep.mubr.f32.mxu0 %v1285
    %1589 = vmatmul.mubr.f32.gmra.mrb[0].mxu0 %v1284
    %v1590 = vpop.f32.mrb[0].mxu0
    %v1591 = vadd.f32 %v1506, %v1590
    %v1592 = vpop.f32.mrb[0].mxu0
    %1593 = vmatprep.mubr.f32.mxu0 %v1293
    %1594 = vmatmul.mubr.f32.gmra.mrb[0].mxu0 %v1292
    %v1595 = vpop.f32.mrb[0].mxu0
    %v1596 = vadd.f32 %v1511, %v1595
    %v1597 = vpop.f32.mrb[0].mxu0
    %1598 = vmatprep.mubr.f32.mxu0 %v1301
    %1599 = vmatmul.mubr.f32.gmra.mrb[0].mxu0 %v1300
    %v1600 = vpop.f32.mrb[0].mxu0
    %v1601 = vadd.f32 %v1516, %v1600
    %v1602 = vpop.f32.mrb[0].mxu0
    %1603 = vdwg.mxu0
    %1604 = vmatprep.subr.mxu0 0.0
    %1605 = vmatpush1.msra.mxu0 %v1370
    %1606 = vmatprep.subr.mxu0 0.0
    %1607 = vmatpush1.msra.mxu0 %v1371
    %1608 = vmatprep.subr.mxu0 0.0
    %1609 = vmatpush1.msra.mxu0 %v1372
    %1610 = vmatprep.subr.mxu0 0.0
    %1611 = vmatpush1.msra.mxu0 %v1373
    %1612 = vmatprep.subr.mxu0 0.0
    %1613 = vmatpush1.msra.mxu0 %v1374
    %1614 = vmatprep.subr.mxu0 0.0
    %1615 = vmatpush1.msra.mxu0 %v1375
    %1616 = vmatprep.subr.mxu0 0.0
    %1617 = vmatpush1.msra.mxu0 %v1376
    %1618 = vmatprep.subr.mxu0 0.0
    %1619 = vmatpush1.msra.mxu0 %v1377
    %1620 = vmatprep.subr.mxu0 0.0
    %1621 = vmatpush1.msra.mxu0 %v1378
    %1622 = vmatprep.subr.mxu0 0.0
    %1623 = vmatpush1.msra.mxu0 %v1379
    %1624 = vmatprep.subr.mxu0 0.0
    %1625 = vmatpush1.msra.mxu0 %v1380
    %1626 = vmatprep.subr.mxu0 0.0
    %1627 = vmatpush1.msra.mxu0 %v1381
    %1628 = vmatprep.subr.mxu0 0.0
    %1629 = vmatpush1.msra.mxu0 %v1382
    %1630 = vmatprep.subr.mxu0 0.0
    %1631 = vmatpush1.msra.mxu0 %v1383
    %1632 = vmatprep.subr.mxu0 0.0
    %1633 = vmatpush1.msra.mxu0 %v1384
    %1634 = vmatprep.subr.mxu0 0.0
    %1635 = vmatpush1.msra.mxu0 %v1385
    %1636 = vmatprep.subr.mxu0 0.0
    %1637 = vmatpush1.msra.mxu0 %v1386
    %1638 = vmatprep.subr.mxu0 0.0
    %1639 = vmatpush1.msra.mxu0 %v1387
    %1640 = vmatprep.subr.mxu0 0.0
    %1641 = vmatpush1.msra.mxu0 %v1388
    %1642 = vmatprep.subr.mxu0 0.0
    %1643 = vmatpush1.msra.mxu0 %v1389
    %1644 = vmatprep.subr.mxu0 0.0
    %1645 = vmatpush1.msra.mxu0 %v1390
    %1646 = vmatprep.subr.mxu0 0.0
    %1647 = vmatpush1.msra.mxu0 %v1391
    %1648 = vmatprep.subr.mxu0 0.0
    %1649 = vmatpush1.msra.mxu0 %v1392
    %1650 = vmatprep.subr.mxu0 0.0
    %1651 = vmatpush1.msra.mxu0 %v1393
    %1652 = vmatprep.subr.mxu0 0.0
    %1653 = vmatpush1.msra.mxu0 %v1394
    %1654 = vmatprep.subr.mxu0 0.0
    %1655 = vmatpush1.msra.mxu0 %v1395
    %1656 = vmatprep.subr.mxu0 0.0
    %1657 = vmatpush1.msra.mxu0 %v1396
    %1658 = vmatprep.subr.mxu0 0.0
    %1659 = vmatpush1.msra.mxu0 %v1397
    %1660 = vmatprep.subr.mxu0 0.0
    %1661 = vmatpush1.msra.mxu0 %v1398
    %1662 = vmatprep.subr.mxu0 0.0
    %1663 = vmatpush1.msra.mxu0 %v1399
    %1664 = vmatprep.subr.mxu0 0.0
    %1665 = vmatpush1.msra.mxu0 %v1400
    %1666 = vmatprep.subr.mxu0 0.0
    %1667 = vmatpush1.msra.mxu0 %v1401
    %1668 = vmatprep.mubr.f32.mxu0 %v1279
    %1669 = vmatmul.mubr.f32.gmra.mrb[0].mxu0 %v1278
    %v1670 = vpop.f32.mrb[0].mxu0
    %v1671 = vadd.f32 %v1586, %v1670
    %v1672 = vpop.f32.mrb[0].mxu0
    %1673 = vmatprep.mubr.f32.mxu0 %v1287
    %1674 = vmatmul.mubr.f32.gmra.mrb[0].mxu0 %v1286
    %v1675 = vpop.f32.mrb[0].mxu0
    %v1676 = vadd.f32 %v1591, %v1675
    %v1677 = vpop.f32.mrb[0].mxu0
    %1678 = vmatprep.mubr.f32.mxu0 %v1295
    %1679 = vmatmul.mubr.f32.gmra.mrb[0].mxu0 %v1294
    %v1680 = vpop.f32.mrb[0].mxu0
    %v1681 = vadd.f32 %v1596, %v1680
    %v1682 = vpop.f32.mrb[0].mxu0
    %1683 = vmatprep.mubr.f32.mxu0 %v1303
    %1684 = vmatmul.mubr.f32.gmra.mrb[0].mxu0 %v1302
    %v1685 = vpop.f32.mrb[0].mxu0
    %v1686 = vadd.f32 %v1601, %v1685
    %v1687 = vpop.f32.mrb[0].mxu0
    %1688 = vdwg.mxu0
    %1689 = vmatprep.subr.mxu0 0.0
    %1690 = vmatpush1.msra.mxu0 %v1402
    %1691 = vmatprep.subr.mxu0 0.0
    %1692 = vmatpush1.msra.mxu0 %v1403
    %1693 = vmatprep.subr.mxu0 0.0
    %1694 = vmatpush1.msra.mxu0 %v1404
    %1695 = vmatprep.subr.mxu0 0.0
    %1696 = vmatpush1.msra.mxu0 %v1405
    %1697 = vmatprep.subr.mxu0 0.0
    %1698 = vmatpush1.msra.mxu0 %v1406
    %1699 = vmatprep.subr.mxu0 0.0
    %1700 = vmatpush1.msra.mxu0 %v1407
    %1701 = vmatprep.subr.mxu0 0.0
    %1702 = vmatpush1.msra.mxu0 %v1408
    %1703 = vmatprep.subr.mxu0 0.0
    %1704 = vmatpush1.msra.mxu0 %v1409
    %1705 = vmatprep.subr.mxu0 0.0
    %1706 = vmatpush1.msra.mxu0 %v1410
    %1707 = vmatprep.subr.mxu0 0.0
    %1708 = vmatpush1.msra.mxu0 %v1411
    %1709 = vmatprep.subr.mxu0 0.0
    %1710 = vmatpush1.msra.mxu0 %v1412
    %1711 = vmatprep.subr.mxu0 0.0
    %1712 = vmatpush1.msra.mxu0 %v1413
    %1713 = vmatprep.subr.mxu0 0.0
    %1714 = vmatpush1.msra.mxu0 %v1414
    %1715 = vmatprep.subr.mxu0 0.0
    %1716 = vmatpush1.msra.mxu0 %v1415
    %1717 = vmatprep.subr.mxu0 0.0
    %1718 = vmatpush1.msra.mxu0 %v1416
    %1719 = vmatprep.subr.mxu0 0.0
    %1720 = vmatpush1.msra.mxu0 %v1417
    %1721 = vmatprep.subr.mxu0 0.0
    %1722 = vmatpush1.msra.mxu0 %v1418
    %1723 = vmatprep.subr.mxu0 0.0
    %1724 = vmatpush1.msra.mxu0 %v1419
    %1725 = vmatprep.subr.mxu0 0.0
    %1726 = vmatpush1.msra.mxu0 %v1420
    %1727 = vmatprep.subr.mxu0 0.0
    %1728 = vmatpush1.msra.mxu0 %v1421
    %1729 = vmatprep.subr.mxu0 0.0
    %1730 = vmatpush1.msra.mxu0 %v1422
    %1731 = vmatprep.subr.mxu0 0.0
    %1732 = vmatpush1.msra.mxu0 %v1423
    %1733 = vmatprep.subr.mxu0 0.0
    %1734 = vmatpush1.msra.mxu0 %v1424
    %1735 = vmatprep.subr.mxu0 0.0
    %1736 = vmatpush1.msra.mxu0 %v1425
    %1737 = vmatprep.subr.mxu0 0.0
    %1738 = vmatpush1.msra.mxu0 %v1426
    %1739 = vmatprep.subr.mxu0 0.0
    %1740 = vmatpush1.msra.mxu0 %v1427
    %1741 = vmatprep.subr.mxu0 0.0
    %1742 = vmatpush1.msra.mxu0 %v1428
    %1743 = vmatprep.subr.mxu0 0.0
    %1744 = vmatpush1.msra.mxu0 %v1429
    %1745 = vmatprep.subr.mxu0 0.0
    %1746 = vmatpush1.msra.mxu0 %v1430
    %1747 = vmatprep.subr.mxu0 0.0
    %1748 = vmatpush1.msra.mxu0 %v1431
    %1749 = vmatprep.subr.mxu0 0.0
    %1750 = vmatpush1.msra.mxu0 %v1432
    %1751 = vmatprep.subr.mxu0 0.0
    %1752 = vmatpush1.msra.mxu0 %v1433
    %1753 = vmatprep.mubr.f32.mxu0 %v1281
    %1754 = vmatmul.mubr.f32.gmra.mrb[0].mxu0 %v1280
    %v1755 = vpop.f32.mrb[0].mxu0
    %v1756 = vadd.f32 %v1671, %v1755
    %v1757 = vpop.f32.mrb[0].mxu0
    %1758 = vmatprep.mubr.f32.mxu0 %v1289
    %1759 = vmatmul.mubr.f32.gmra.mrb[0].mxu0 %v1288
    %v1760 = vpop.f32.mrb[0].mxu0
    %v1761 = vadd.f32 %v1676, %v1760
    %v1762 = vpop.f32.mrb[0].mxu0
    %1763 = vmatprep.mubr.f32.mxu0 %v1297
    %1764 = vmatmul.mubr.f32.gmra.mrb[0].mxu0 %v1296
    %v1765 = vpop.f32.mrb[0].mxu0
    %v1766 = vadd.f32 %v1681, %v1765
    %v1767 = vpop.f32.mrb[0].mxu0
    %1768 = vmatprep.mubr.f32.mxu0 %v1305
    %1769 = vmatmul.mubr.f32.gmra.mrb[0].mxu0 %v1304
    %v1770 = vpop.f32.mrb[0].mxu0
    %v1771 = vadd.f32 %v1686, %v1770
    %v1772 = vpop.f32.mrb[0].mxu0
    %1773 = vdwg.mxu0
    %v1774 = vld [vmem:[%s4] sm:$0xff]
    %v1775 = vld [vmem:[%s4 + $0x8] sm:$0xff]
    %v1776 = vld [vmem:[%s4 + $0x10] sm:$0xff]
    %v1777 = vld [vmem:[%s4 + $0x18] sm:$0xff]
    %v1778 = vld [vmem:[%s4 + $0x20] sm:$0xff]
    %v1779 = vld [vmem:[%s4 + $0x28] sm:$0xff]
    %v1780 = vld [vmem:[%s4 + $0x30] sm:$0xff]
    %v1781 = vld [vmem:[%s4 + $0x38] sm:$0xff]
    %s1782 = sld [smem:[#allocation3]]
    %v1783 = vstv %s1782
    %vm1784 = vcmask 261120
    %v1786 = vsel %vm1784, %v1774, 0
    %v1789 = vsel %vm1784, %v1775, 0
    %v1792 = vsel %vm1784, %v1776, 0
    %v1795 = vsel %vm1784, %v1777, 0
    %v1798 = vsel %vm1784, %v1778, 0
    %v1801 = vsel %vm1784, %v1779, 0
    %v1804 = vsel %vm1784, %v1780, 0
    %v1807 = vsel %vm1784, %v1781, 0
    %1809 = vmatprep.subr.mxu0 0.0
    %1810 = vmatpush1.msra.mxu0 %v1756
    %1811 = vmatprep.subr.mxu0 0.0
    %1812 = vmatpush1.msra.mxu0 %v1761
    %1813 = vmatprep.subr.mxu0 0.0
    %1814 = vmatpush1.msra.mxu0 %v1766
    %1815 = vmatprep.subr.mxu0 0.0
    %1816 = vmatpush1.msra.mxu0 %v1771
    %1817 = vmatprep.subr.mxu0 0.0
    %1818 = vmatpush1.msra.mxu0 0.0
    %1819 = vmatprep.subr.mxu0 0.0
    %1820 = vmatpush1.msra.mxu0 0.0
    %1821 = vmatprep.subr.mxu0 0.0
    %1822 = vmatpush1.msra.mxu0 0.0
    %1823 = vmatprep.subr.mxu0 0.0
    %1824 = vmatpush1.msra.mxu0 0.0
    %1825 = vmatprep.subr.mxu0 0.0
    %1826 = vmatpush1.msra.mxu0 0.0
    %1827 = vmatprep.subr.mxu0 0.0
    %1828 = vmatpush1.msra.mxu0 0.0
    %1829 = vmatprep.subr.mxu0 0.0
    %1830 = vmatpush1.msra.mxu0 0.0
    %1831 = vmatprep.subr.mxu0 0.0
    %1832 = vmatpush1.msra.mxu0 0.0
    %1833 = vmatprep.subr.mxu0 0.0
    %1834 = vmatpush1.msra.mxu0 0.0
    %1835 = vmatprep.subr.mxu0 0.0
    %1836 = vmatpush1.msra.mxu0 0.0
    %1837 = vmatprep.subr.mxu0 0.0
    %1838 = vmatpush1.msra.mxu0 0.0
    %1839 = vmatprep.subr.mxu0 0.0
    %1840 = vmatpush1.msra.mxu0 0.0
    %1841 = vmatprep.subr.mxu0 0.0
    %1842 = vmatpush1.msra.mxu0 0.0
    %1843 = vmatprep.subr.mxu0 0.0
    %1844 = vmatpush1.msra.mxu0 0.0
    %1845 = vmatprep.subr.mxu0 0.0
    %1846 = vmatpush1.msra.mxu0 0.0
    %1847 = vmatprep.subr.mxu0 0.0
    %1848 = vmatpush1.msra.mxu0 0.0
    %1849 = vmatprep.subr.mxu0 0.0
    %1850 = vmatpush1.msra.mxu0 0.0
    %1851 = vmatprep.subr.mxu0 0.0
    %1852 = vmatpush1.msra.mxu0 0.0
    %1853 = vmatprep.subr.mxu0 0.0
    %1854 = vmatpush1.msra.mxu0 0.0
    %1855 = vmatprep.subr.mxu0 0.0
    %1856 = vmatpush1.msra.mxu0 0.0
    %1857 = vmatprep.subr.mxu0 0.0
    %1858 = vmatpush1.msra.mxu0 0.0
    %1859 = vmatprep.subr.mxu0 0.0
    %1860 = vmatpush1.msra.mxu0 0.0
    %1861 = vmatprep.subr.mxu0 0.0
    %1862 = vmatpush1.msra.mxu0 0.0
    %1863 = vmatprep.subr.mxu0 0.0
    %1864 = vmatpush1.msra.mxu0 0.0
    %1865 = vmatprep.subr.mxu0 0.0
    %1866 = vmatpush1.msra.mxu0 0.0
    %1867 = vmatprep.subr.mxu0 0.0
    %1868 = vmatpush1.msra.mxu0 0.0
    %1869 = vmatprep.subr.mxu0 0.0
    %1870 = vmatpush1.msra.mxu0 0.0
    %1871 = vmatprep.subr.mxu0 0.0
    %1872 = vmatpush1.msra.mxu0 0.0
    %1873 = vmatprep.mubr.f32.mxu0 0.0
    %1874 = vmatmul.mubr.f32.gmra.mrb[0].mxu0 %v1786
    %v1875 = vpop.f32.mrb[0].mxu0
    %v1876 = vadd.f32 %v1783, %v1875
    %v1877 = vpop.f32.mrb[0].mxu0
    %1878 = vmatprep.mubr.f32.mxu0 0.0
    %1879 = vmatmul.mubr.f32.gmra.mrb[0].mxu0 %v1789
    %v1880 = vpop.f32.mrb[0].mxu0
    %v1881 = vadd.f32 %v1783, %v1880
    %v1882 = vpop.f32.mrb[0].mxu0
    %1883 = vmatprep.mubr.f32.mxu0 0.0
    %1884 = vmatmul.mubr.f32.gmra.mrb[0].mxu0 %v1792
    %v1885 = vpop.f32.mrb[0].mxu0
    %v1886 = vadd.f32 %v1783, %v1885
    %v1887 = vpop.f32.mrb[0].mxu0
    %1888 = vmatprep.mubr.f32.mxu0 0.0
    %1889 = vmatmul.mubr.f32.gmra.mrb[0].mxu0 %v1795
    %v1890 = vpop.f32.mrb[0].mxu0
    %v1891 = vadd.f32 %v1783, %v1890
    %v1892 = vpop.f32.mrb[0].mxu0
    %1893 = vmatprep.mubr.f32.mxu0 0.0
    %1894 = vmatmul.mubr.f32.gmra.mrb[0].mxu0 %v1798
    %v1895 = vpop.f32.mrb[0].mxu0
    %v1896 = vadd.f32 %v1783, %v1895
    %v1897 = vpop.f32.mrb[0].mxu0
    %1898 = vmatprep.mubr.f32.mxu0 0.0
    %1899 = vmatmul.mubr.f32.gmra.mrb[0].mxu0 %v1801
    %v1900 = vpop.f32.mrb[0].mxu0
    %v1901 = vadd.f32 %v1783, %v1900
    %v1902 = vpop.f32.mrb[0].mxu0
    %1903 = vmatprep.mubr.f32.mxu0 0.0
    %1904 = vmatmul.mubr.f32.gmra.mrb[0].mxu0 %v1804
    %v1905 = vpop.f32.mrb[0].mxu0
    %v1906 = vadd.f32 %v1783, %v1905
    %v1907 = vpop.f32.mrb[0].mxu0
    %1908 = vmatprep.mubr.f32.mxu0 0.0
    %1909 = vmatmul.mubr.f32.gmra.mrb[0].mxu0 %v1807
    %v1910 = vpop.f32.mrb[0].mxu0
    %v1911 = vadd.f32 %v1783, %v1910
    %v1912 = vpop.f32.mrb[0].mxu0
    %1913 = vdwg.mxu0
    %1914 = vst.msk [vmem:[%s6] sm:$0xff] %vm1784, %v1876
    %1915 = vst.msk [vmem:[%s6 + $0x8] sm:$0xff] %vm1784, %v1881
    %1916 = vst.msk [vmem:[%s6 + $0x10] sm:$0xff] %vm1784, %v1886
    %1917 = vst.msk [vmem:[%s6 + $0x18] sm:$0xff] %vm1784, %v1891
    %1918 = vst.msk [vmem:[%s6 + $0x20] sm:$0xff] %vm1784, %v1896
    %1919 = vst.msk [vmem:[%s6 + $0x28] sm:$0xff] %vm1784, %v1901
    %1920 = vst.msk [vmem:[%s6 + $0x30] sm:$0xff] %vm1784, %v1906
    %1921 = vst.msk [vmem:[%s6 + $0x38] sm:$0xff] %vm1784, %v1911
    // Predicated region
    $region42: #{tpu_custom_call.1} parent=1 // pred_check
      _
    $region43: #{tpu_custom_call.1} parent=1 // pred_check_branch
      %1923 = sbr.rel (0) target = $region45
    $region44: #{tpu_custom_call.1} parent=1 // pred_region
      _
    $region45: #{tpu_custom_call.1} parent=1 // pred_fallthru
      _
    // Predicated region
    $region46: #{tpu_custom_call.1} parent=1 // pred_check
      _
    $region47: #{tpu_custom_call.1} parent=1 // pred_check_branch
      %1925 = sbr.rel (0) target = $region49
    $region48: #{tpu_custom_call.1} parent=1 // pred_region
      _
    $region49: #{tpu_custom_call.1} parent=1 // pred_fallthru
      _
    %1926 = vsyncpa [#allocation5], 1
    %1927 = vsyncpa [#allocation7], 1

</llo_original>
